<compile_context>
chip_gen: v6e
topology: v6e:2x2x1
jax: 0.10.0
libtpu: 0.0.40
codegen_flags: <defaults>
</compile_context>

<pallas_src>
import functools

import jax
import jax.numpy as jnp
from jax.experimental import pallas as pl
from jax.experimental.pallas import tpu as pltpu

# ---------------------------------------------------------------------------
# Problem sizes (small, consistent with the module's forward)
# ---------------------------------------------------------------------------
BATCH = 2            # videos
NUM_SEGMENTS = 8     # TSN segments per video
NUM_CLASS = 8        # categorical classes
H = W = 16           # spatial size of each frame
SAMPLE_LEN = 3       # RGB, new_length=1  -> 3 channels per segment
FEAT_DIM = 2048      # ResNet50 feature dim (num_feats)
FRAME_FLAT = SAMPLE_LEN * H * W          # 768, multiple of 128
HEAD_PAD = 128                           # padded output columns (>= num_class+1)
FEAT_BLK = 512                           # FEAT_DIM streamed in 2048/512 = 4 blocks


def _tsn_kernel(frames_ref, wproj_ref, bproj_ref, whead_ref, bhead_ref,
                sel_ref, out_ref, acc_ref):
    """Fused TSN forward, streamed over FEAT_DIM blocks.

    frames_ref: (B*S, 3*H*W)        bf16   resident across grid
    wproj_ref : (3*H*W, FEAT_BLK)   bf16   synthetic backbone weight block
    bproj_ref : (1, FEAT_BLK)       f32
    whead_ref : (FEAT_BLK, HEAD_PAD) bf16  fused new_fc / new_fc_1 block
    bhead_ref : (1, HEAD_PAD)       f32
    sel_ref   : (B, B*S)            f32    consensus averaging selector (1/S)
    out_ref   : (B, HEAD_PAD)       f32    consensus-averaged logits
    acc_ref   : (B*S, HEAD_PAD)     f32    VMEM logits accumulator
    """
    k = pl.program_id(0)

    @pl.when(k == 0)
    def _():
        acc_ref[...] = jnp.zeros_like(acc_ref)

    # --- synthetic base_model block: linear projection + ReLU (bf16 in, f32 acc) ---
    feats = jnp.dot(frames_ref[...], wproj_ref[...],
                    preferred_element_type=jnp.float32)       # (BS, FEAT_BLK)
    feats = jnp.maximum(feats + bproj_ref[...], 0.0)
    # dropout(p=0.8) on pooled features: identity in eval mode.

    # --- partial contribution of this FEAT block to the fused heads ---
    acc_ref[...] += jnp.dot(feats.astype(jnp.bfloat16), whead_ref[...],
                            preferred_element_type=jnp.float32)  # (BS, HEAD_PAD)

    @pl.when(k == pl.num_programs(0) - 1)
    def _():
        logits = acc_ref[...] + bhead_ref[...]                  # (BS, HEAD_PAD)
        # consensus: mean over segments as a tiny selector matmul on the MXU.
        out_ref[...] = jnp.dot(sel_ref[...], logits,
                               preferred_element_type=jnp.float32)  # (B, HEAD_PAD)


@functools.partial(jax.jit, static_argnames=("batch", "num_segments", "num_class"))
def tsn_forward(frames, w_proj, b_proj, w_head, b_head, *,
                batch=BATCH, num_segments=NUM_SEGMENTS, num_class=NUM_CLASS):
    """frames: (B, S*3, H, W) NCHW, like PyTorch `input`.

    Returns dict with 'categorical' (B, num_class) and 'continuous' (B, 1),
    matching TSN.forward's outputs dict.
    """
    bs = batch * num_segments
    # body = input.view((-1, sample_len) + input.size()[-2:])  -> (B*S, 3, H, W)
    body_flat = frames.reshape(bs, FRAME_FLAT).astype(jnp.bfloat16)
    w_proj_bf = w_proj.astype(jnp.bfloat16)
    w_head_bf = w_head.astype(jnp.bfloat16)

    # consensus selector: out[b] = (1/S) * sum_s logits[b*S + s]
    sel = jnp.repeat(jnp.eye(batch, dtype=jnp.float32),
                     num_segments, axis=1) / float(num_segments)   # (B, B*S)

    n_blk = FEAT_DIM // FEAT_BLK
    flops = (2 * bs * FRAME_FLAT * FEAT_DIM          # backbone projection
             + 2 * bs * FEAT_DIM * HEAD_PAD          # fused heads
             + 2 * batch * bs * HEAD_PAD)            # consensus matmul
    bytes_accessed = (bs * FRAME_FLAT * 2            # bf16 frames
                      + FRAME_FLAT * FEAT_DIM * 2    # bf16 w_proj
                      + FEAT_DIM * HEAD_PAD * 2      # bf16 w_head
                      + FEAT_DIM * 4 + HEAD_PAD * 4  # f32 biases
                      + batch * bs * 4               # selector
                      + batch * HEAD_PAD * 4)        # output

    out = pl.pallas_call(
        _tsn_kernel,
        out_shape=jax.ShapeDtypeStruct((batch, HEAD_PAD), jnp.float32),
        grid_spec=pltpu.PrefetchScalarGridSpec(
            num_scalar_prefetch=0,
            grid=(n_blk,),
            in_specs=[
                pl.BlockSpec((bs, FRAME_FLAT), lambda k: (0, 0)),        # resident
                pl.BlockSpec((FRAME_FLAT, FEAT_BLK), lambda k: (0, k)),  # streamed
                pl.BlockSpec((1, FEAT_BLK), lambda k: (0, k)),           # streamed
                pl.BlockSpec((FEAT_BLK, HEAD_PAD), lambda k: (k, 0)),    # streamed
                pl.BlockSpec((1, HEAD_PAD), lambda k: (0, 0)),           # resident
                pl.BlockSpec((batch, bs), lambda k: (0, 0)),             # resident
            ],
            out_specs=pl.BlockSpec((batch, HEAD_PAD), lambda k: (0, 0)),
            scratch_shapes=[pltpu.VMEM((bs, HEAD_PAD), jnp.float32)],
        ),
        compiler_params=pltpu.CompilerParams(
            dimension_semantics=("arbitrary",),
            vmem_limit_bytes=16 * 1024 * 1024),
        cost_estimate=pl.CostEstimate(flops=flops, transcendentals=0,
                                      bytes_accessed=bytes_accessed),
    )(body_flat, w_proj_bf, b_proj, w_head_bf, b_head, sel)

    return {
        "categorical": out[:, :num_class],              # consensus(new_fc(base_out)).squeeze(1)
        "continuous": out[:, num_class:num_class + 1],  # consensus(new_fc_1(base_out)).squeeze(1)
    }


def _reference_forward(frames, w_proj, b_proj, w_head, b_head):
    """Pure-JAX reference with the same bf16-in / f32-accumulate dtype flow."""
    bs = BATCH * NUM_SEGMENTS
    body = frames.reshape(bs, FRAME_FLAT).astype(jnp.bfloat16)
    feats = jnp.dot(body, w_proj.astype(jnp.bfloat16),
                    preferred_element_type=jnp.float32)
    feats = jnp.maximum(feats + b_proj, 0.0)
    logits = jnp.dot(feats.astype(jnp.bfloat16), w_head.astype(jnp.bfloat16),
                     preferred_element_type=jnp.float32) + b_head
    cons = jnp.mean(logits.reshape(BATCH, NUM_SEGMENTS, HEAD_PAD), axis=1)
    return {"categorical": cons[:, :NUM_CLASS],
            "continuous": cons[:, NUM_CLASS:NUM_CLASS + 1]}


def _init_params(key):
    k1, k2, k3, k4 = jax.random.split(key, 4)
    # synthetic backbone (stand-in for ResNet50 features)
    w_proj = (jax.random.normal(k1, (FRAME_FLAT, FEAT_DIM), jnp.float32)
              * (1.0 / jnp.sqrt(FRAME_FLAT)))
    b_proj = jnp.zeros((1, FEAT_DIM), jnp.float32)

    # new_fc: Linear(2048, num_class)  (PyTorch default-style small init)
    w_cat = (jax.random.normal(k2, (FEAT_DIM, NUM_CLASS), jnp.float32)
             * (1.0 / jnp.sqrt(FEAT_DIM)))
    b_cat = jax.random.normal(k3, (NUM_CLASS,), jnp.float32) * 0.01
    # new_fc_1: Linear(2048, 1), normal(0, 0.001) weight, zero bias
    w_cont = jax.random.normal(k4, (FEAT_DIM, 1), jnp.float32) * 0.001
    b_cont = jnp.zeros((1,), jnp.float32)

    # fuse heads into one lane-padded (FEAT_DIM, 128) matrix; padding columns
    # MUST stay exactly zero (consensus averages the full padded lane width).
    w_head = jnp.zeros((FEAT_DIM, HEAD_PAD), jnp.float32)
    w_head = w_head.at[:, :NUM_CLASS].set(w_cat)
    w_head = w_head.at[:, NUM_CLASS:NUM_CLASS + 1].set(w_cont)
    b_head = jnp.zeros((1, HEAD_PAD), jnp.float32)
    b_head = b_head.at[0, :NUM_CLASS].set(b_cat)
    b_head = b_head.at[0, NUM_CLASS:NUM_CLASS + 1].set(b_cont)
    return w_proj, b_proj, w_head, b_head


if __name__ == "__main__":
    key = jax.random.PRNGKey(0)
    kx, kp = jax.random.split(key)

    # input like PyTorch forward's `input`: (B, num_segments*3, H, W), NCHW
    frames = jax.random.normal(kx, (BATCH, NUM_SEGMENTS * SAMPLE_LEN, H, W),
                               jnp.float32)
    # `embeddings` arg of forward is unused when graph=False.
    w_proj, b_proj, w_head, b_head = _init_params(kp)

    outputs = tsn_forward(frames, w_proj, b_proj, w_head, b_head)
    jax.block_until_ready(outputs)

    ref = _reference_forward(frames, w_proj, b_proj, w_head, b_head)
    assert outputs["categorical"].shape == (BATCH, NUM_CLASS)
    assert outputs["continuous"].shape == (BATCH, 1)
    assert jnp.allclose(outputs["categorical"], ref["categorical"],
                        atol=5e-3, rtol=5e-3)
    assert jnp.allclose(outputs["continuous"], ref["continuous"],
                        atol=5e-3, rtol=5e-3)
    print("KERNEL_OK")
</pallas_src>

<mosaic_0001>
module attributes {stable_mosaic.version = 11 : i64} {
  func.func @_tsn_kernel(%arg0: i32, %arg1: memref<16x768xbf16, #tpu.memory_space<vmem>>, %arg2: memref<768x512xbf16, #tpu.memory_space<vmem>>, %arg3: memref<1x512xf32, #tpu.memory_space<vmem>>, %arg4: memref<512x128xbf16, #tpu.memory_space<vmem>>, %arg5: memref<1x128xf32, #tpu.memory_space<vmem>>, %arg6: memref<2x16xf32, #tpu.memory_space<vmem>>, %arg7: memref<2x128xf32, #tpu.memory_space<vmem>>, %arg8: memref<16x128xf32, #tpu.memory_space<vmem>>) attributes {dimension_semantics = [#tpu.dimension_semantics<arbitrary>], iteration_bounds = array<i64: 4>, scalar_prefetch = 0 : i64, scratch_operands = 1 : i64, tpu.core_type = #tpu.core_type<tc>, window_params = [{pipeline_mode = #tpu.pipeline_mode<synchronous>, transform_indices = @transform_0, window_bounds = array<i64: 16, 768>}, {transform_indices = @transform_1, window_bounds = array<i64: 768, 512>}, {transform_indices = @transform_2, window_bounds = array<i64: 1, 512>}, {transform_indices = @transform_3, window_bounds = array<i64: 512, 128>}, {pipeline_mode = #tpu.pipeline_mode<synchronous>, transform_indices = @transform_4, window_bounds = array<i64: 1, 128>}, {pipeline_mode = #tpu.pipeline_mode<synchronous>, transform_indices = @transform_5, window_bounds = array<i64: 2, 16>}, {pipeline_mode = #tpu.pipeline_mode<synchronous>, transform_indices = @transform_6, window_bounds = array<i64: 2, 128>}]} {
    %c0_i32 = arith.constant 0 : i32
    %0 = arith.cmpi eq, %arg0, %c0_i32 : i32
    %1 = arith.extui %0 : i1 to i32
    %c0_i32_0 = arith.constant 0 : i32
    %2 = arith.cmpi ne, %1, %c0_i32_0 : i32
    scf.if %2 {
      %cst_15 = arith.constant 0.000000e+00 : f32
      %20 = vector.broadcast %cst_15 : f32 to vector<16x128xf32>
      %c0_16 = arith.constant 0 : index
      %c0_17 = arith.constant 0 : index
      %21 = vector.load %arg8[%c0_16, %c0_17] : memref<16x128xf32, #tpu.memory_space<vmem>>, vector<16x128xf32>
      tpu.vector_store %arg8[%c0_16, %c0_17], %20 {strides = array<i32>} : memref<16x128xf32, #tpu.memory_space<vmem>>, vector<16x128xf32>,
    } else {
    }
    %c0 = arith.constant 0 : index
    %c0_1 = arith.constant 0 : index
    %3 = vector.load %arg1[%c0, %c0_1] : memref<16x768xbf16, #tpu.memory_space<vmem>>, vector<16x768xbf16>
    %c0_2 = arith.constant 0 : index
    %c0_3 = arith.constant 0 : index
    %4 = vector.load %arg2[%c0_2, %c0_3] : memref<768x512xbf16, #tpu.memory_space<vmem>>, vector<768x512xbf16>
    %cst = arith.constant dense<0.000000e+00> : vector<16x512xf32>
    %5 = tpu.matmul %3, %4, %cst {dimension_numbers = #tpu.dot_dimension_numbers<[1], [0], [0], [1], [0, 0, 1, 1], [], []>} : vector<16x768xbf16>, vector<768x512xbf16>, vector<16x512xf32> -> vector<16x512xf32>
    %c0_4 = arith.constant 0 : index
    %c0_5 = arith.constant 0 : index
    %6 = vector.load %arg3[%c0_4, %c0_5] : memref<1x512xf32, #tpu.memory_space<vmem>>, vector<1x512xf32>
    %7 = vector.broadcast %6 : vector<1x512xf32> to vector<16x512xf32>
    %8 = arith.addf %5, %7 : vector<16x512xf32>
    %cst_6 = arith.constant 0.000000e+00 : f32
    %9 = vector.broadcast %cst_6 : f32 to vector<16x512xf32>
    %10 = arith.maximumf %8, %9 : vector<16x512xf32>
    %c0_7 = arith.constant 0 : index
    %c0_8 = arith.constant 0 : index
    %11 = vector.load %arg8[%c0_7, %c0_8] : memref<16x128xf32, #tpu.memory_space<vmem>>, vector<16x128xf32>
    %12 = arith.truncf %10 : vector<16x512xf32> to vector<16x512xbf16>
    %c0_9 = arith.constant 0 : index
    %c0_10 = arith.constant 0 : index
    %13 = vector.load %arg4[%c0_9, %c0_10] : memref<512x128xbf16, #tpu.memory_space<vmem>>, vector<512x128xbf16>
    %cst_11 = arith.constant dense<0.000000e+00> : vector<16x128xf32>
    %14 = tpu.matmul %12, %13, %cst_11 {dimension_numbers = #tpu.dot_dimension_numbers<[1], [0], [0], [1], [0, 0, 1, 1], [], []>} : vector<16x512xbf16>, vector<512x128xbf16>, vector<16x128xf32> -> vector<16x128xf32>
    %15 = arith.addf %11, %14 : vector<16x128xf32>
    %c0_12 = arith.constant 0 : index
    %c0_13 = arith.constant 0 : index
    %16 = vector.load %arg8[%c0_12, %c0_13] : memref<16x128xf32, #tpu.memory_space<vmem>>, vector<16x128xf32>
    tpu.vector_store %arg8[%c0_12, %c0_13], %15 {strides = array<i32>} : memref<16x128xf32, #tpu.memory_space<vmem>>, vector<16x128xf32>,
    %c3_i32 = arith.constant 3 : i32
    %17 = arith.cmpi eq, %arg0, %c3_i32 : i32
    %18 = arith.extui %17 : i1 to i32
    %c0_i32_14 = arith.constant 0 : i32
    %19 = arith.cmpi ne, %18, %c0_i32_14 : i32
    scf.if %19 {
      %c0_15 = arith.constant 0 : index
      %c0_16 = arith.constant 0 : index
      %20 = vector.load %arg8[%c0_15, %c0_16] : memref<16x128xf32, #tpu.memory_space<vmem>>, vector<16x128xf32>
      %c0_17 = arith.constant 0 : index
      %c0_18 = arith.constant 0 : index
      %21 = vector.load %arg5[%c0_17, %c0_18] : memref<1x128xf32, #tpu.memory_space<vmem>>, vector<1x128xf32>
      %22 = vector.broadcast %21 : vector<1x128xf32> to vector<16x128xf32>
      %23 = arith.addf %20, %22 : vector<16x128xf32>
      %c0_19 = arith.constant 0 : index
      %c0_20 = arith.constant 0 : index
      %24 = vector.load %arg6[%c0_19, %c0_20] : memref<2x16xf32, #tpu.memory_space<vmem>>, vector<2x16xf32>
      %cst_21 = arith.constant dense<0.000000e+00> : vector<2x128xf32>
      %25 = tpu.matmul %24, %23, %cst_21 {dimension_numbers = #tpu.dot_dimension_numbers<[1], [0], [0], [1], [0, 0, 1, 1], [], []>} : vector<2x16xf32>, vector<16x128xf32>, vector<2x128xf32> -> vector<2x128xf32>
      %c0_22 = arith.constant 0 : index
      %c0_23 = arith.constant 0 : index
      %26 = vector.load %arg7[%c0_22, %c0_23] : memref<2x128xf32, #tpu.memory_space<vmem>>, vector<2x128xf32>
      tpu.vector_store %arg7[%c0_22, %c0_23], %25 {strides = array<i32>} : memref<2x128xf32, #tpu.memory_space<vmem>>, vector<2x128xf32>,
    } else {
    }
    return
  }
  func.func @transform_0(%arg0: i32) -> (i32, i32) {
    %c0_i32 = arith.constant 0 : i32
    %c0_i32_0 = arith.constant 0 : i32
    %c0_i32_1 = arith.constant 0 : i32
    return %c0_i32, %c0_i32_0 : i32, i32
  }
  func.func @transform_1(%arg0: i32) -> (i32, i32) {
    %c0_i32 = arith.constant 0 : i32
    %c0_i32_0 = arith.constant 0 : i32
    return %c0_i32, %arg0 : i32, i32
  }
  func.func @transform_2(%arg0: i32) -> (i32, i32) {
    %c0_i32 = arith.constant 0 : i32
    %c0_i32_0 = arith.constant 0 : i32
    return %c0_i32, %arg0 : i32, i32
  }
  func.func @transform_3(%arg0: i32) -> (i32, i32) {
    %c0_i32 = arith.constant 0 : i32
    %c0_i32_0 = arith.constant 0 : i32
    return %arg0, %c0_i32 : i32, i32
  }
  func.func @transform_4(%arg0: i32) -> (i32, i32) {
    %c0_i32 = arith.constant 0 : i32
    %c0_i32_0 = arith.constant 0 : i32
    %c0_i32_1 = arith.constant 0 : i32
    return %c0_i32, %c0_i32_0 : i32, i32
  }
  func.func @transform_5(%arg0: i32) -> (i32, i32) {
    %c0_i32 = arith.constant 0 : i32
    %c0_i32_0 = arith.constant 0 : i32
    %c0_i32_1 = arith.constant 0 : i32
    return %c0_i32, %c0_i32_0 : i32, i32
  }
  func.func @transform_6(%arg0: i32) -> (i32, i32) {
    %c0_i32 = arith.constant 0 : i32
    %c0_i32_0 = arith.constant 0 : i32
    %c0_i32_1 = arith.constant 0 : i32
    return %c0_i32, %c0_i32_0 : i32, i32
  }
}

</mosaic_0001>

<llo_original>
// kernel: tsn_forward.1
$region0: #{tsn_forward.1}
  #allocation0 [shape = 'u32[]', space=smem, size = 0x4, offset = 0x4, fixed_abs, tag = 'smem constant byte address 0x4 - core index']
  #allocation1 [shape = 'u32[144,128]{1,0:T(1,128)}', space=vmem, size = 0x12000, scoped, tag = 'internal scratch']
  #allocation2 [shape = 'f32[16,128]{1,0:T(8,128)}', space=vmem, size = 0x2000, scoped, tag = 'scratch operand']
  %s0 = inlined_call_operand.vmem [shape: bf16[16,768], index: 0, kind: input, shape index: {}]
  %s1 = inlined_call_operand.vmem [shape: bf16[768,2048], index: 1, kind: input, shape index: {}]
  %s2 = inlined_call_operand.vmem [shape: f32[1,2048], index: 2, kind: input, shape index: {}]
  %s3 = inlined_call_operand.vmem [shape: bf16[2048,128], index: 3, kind: input, shape index: {}]
  %s4 = inlined_call_operand.vmem [shape: f32[1,128], index: 4, kind: input, shape index: {}]
  %s5 = inlined_call_operand.vmem [shape: f32[2,16], index: 5, kind: input, shape index: {}]
  %s6 = inlined_call_operand.vmem [shape: f32[2,128], index: 6, kind: output, shape index: {}]
  %s7 = sld [smem:[#allocation0]]
  $region88: #{tsn_forward.1} parent=0
    _
  %s9 = ssub.s32 1, %s7
  %s10 = scalar_select 0, %s9, %s7
  $region1: #{tsn_forward.1} parent=0
    #allocation3 [shape = 'u8[1572864]{0}', space=vmem, size = 0x180000, scoped, tag = 'input window, operand 1']
    loop: start=0, step=1, limit=6
    $region2: #{tsn_forward.1} parent=1 // loop_pre_header
      _
    $region3: #{tsn_forward.1} parent=1 // loop_header
      %s12 = sphi 0, %s16
      %p13 = scmp.ge.s32.totalorder %s12, 6
      %s20 = sphi 0, %s20
      %s22 = sphi 0, %s20
      %s23 = sphi 0, %s22
      %s37 = sphi 0, %s23
      %s43 = sphi 0, %s45
      %s46 = sphi 0, %s43
      %s47 = sphi 0, %s46
      %s63 = sphi 0, %s47
      %s69 = sphi 0, %s71
      %s72 = sphi 0, %s69
      %s73 = sphi 0, %s72
      %s89 = sphi 0, %s73
      %s95 = sphi 0, %s97
      %s98 = sphi 0, %s95
      %s99 = sphi 0, %s98
      %s115 = sphi 0, %s99
      %s119 = sphi 0, %s119
      %s121 = sphi 0, %s119
      %s122 = sphi 0, %s121
      %s136 = sphi 0, %s122
      %s140 = sphi 0, %s140
      %s142 = sphi 0, %s140
      %s143 = sphi 0, %s142
      %s157 = sphi 0, %s143
      %s161 = sphi 0, %s161
      %s163 = sphi 0, %s161
      %s164 = sphi 0, %s163
      %s178 = sphi 0, %s164
    $region4: #{tsn_forward.1} parent=1 // loop_header_branch
      %15 = sbr.rel (%p13) target = $region8
    $region5: #{tsn_forward.1} parent=1 // loop_body
      %s17 = ssub.s32 %s12, 1
      %s18 = ssub.s32 %s12, 2
      %s19 = sadd.s32 %s12, 1
      %s21 = sadd.s32 %s20, 1
      %p24 = scmp.eq.s32.totalorder %s12, 3
      %p25 = scmp.ne.s32.totalorder %s20, %s22
      %p26 = scmp.eq.s32.totalorder %s12, 0
      %p27 = por %p25, %p26
      %p28 = scmp.ne.s32.totalorder %s20, %s22
      %p29 = scmp.eq.s32.totalorder %s17, 3
      %p30 = por %p28, %p29
      %p31 = scmp.ne.s32.totalorder %s22, %s23
      %p32 = scmp.eq.s32.totalorder %s17, 0
      %p33 = por %p31, %p32
      %p34 = scmp.ne.s32.totalorder %s22, %s23
      %p35 = scmp.eq.s32.totalorder %s18, 3
      %p36 = por %p34, %p35
      %p38 = scmp.ne.s32.totalorder %s23, %s37
      %p39 = scmp.eq.s32.totalorder %s18, 0
      %p40 = por %p38, %p39
      %s41 = ssub.s32 %s12, %s19
      %p42 = scmp.eq.s32.totalorder %s41, 0
      %s44 = sadd.s32 %s43, 1
      %s45 = scalar_select %p42, %s43, %s44
      %p48 = pneg %p42
      %p49 = scmp.eq.s32.totalorder %s12, 3
      %p50 = por %p48, %p49
      %p51 = scmp.ne.s32.totalorder %s43, %s46
      %p52 = scmp.eq.s32.totalorder %s12, 0
      %p53 = por %p51, %p52
      %p54 = scmp.ne.s32.totalorder %s43, %s46
      %p55 = scmp.eq.s32.totalorder %s17, 3
      %p56 = por %p54, %p55
      %p57 = scmp.ne.s32.totalorder %s46, %s47
      %p58 = scmp.eq.s32.totalorder %s17, 0
      %p59 = por %p57, %p58
      %p60 = scmp.ne.s32.totalorder %s46, %s47
      %p61 = scmp.eq.s32.totalorder %s18, 3
      %p62 = por %p60, %p61
      %p64 = scmp.ne.s32.totalorder %s47, %s63
      %p65 = scmp.eq.s32.totalorder %s18, 0
      %p66 = por %p64, %p65
      %s67 = ssub.s32 %s12, %s19
      %p68 = scmp.eq.s32.totalorder %s67, 0
      %s70 = sadd.s32 %s69, 1
      %s71 = scalar_select %p68, %s69, %s70
      %p74 = pneg %p68
      %p75 = scmp.eq.s32.totalorder %s12, 3
      %p76 = por %p74, %p75
      %p77 = scmp.ne.s32.totalorder %s69, %s72
      %p78 = scmp.eq.s32.totalorder %s12, 0
      %p79 = por %p77, %p78
      %p80 = scmp.ne.s32.totalorder %s69, %s72
      %p81 = scmp.eq.s32.totalorder %s17, 3
      %p82 = por %p80, %p81
      %p83 = scmp.ne.s32.totalorder %s72, %s73
      %p84 = scmp.eq.s32.totalorder %s17, 0
      %p85 = por %p83, %p84
      %p86 = scmp.ne.s32.totalorder %s72, %s73
      %p87 = scmp.eq.s32.totalorder %s18, 3
      %p88 = por %p86, %p87
      %p90 = scmp.ne.s32.totalorder %s73, %s89
      %p91 = scmp.eq.s32.totalorder %s18, 0
      %p92 = por %p90, %p91
      %s93 = ssub.s32 %s12, %s19
      %p94 = scmp.eq.s32.totalorder %s93, 0
      %s96 = sadd.s32 %s95, 1
      %s97 = scalar_select %p94, %s95, %s96
      %p100 = pneg %p94
      %p101 = scmp.eq.s32.totalorder %s12, 3
      %p102 = por %p100, %p101
      %p103 = scmp.ne.s32.totalorder %s95, %s98
      %p104 = scmp.eq.s32.totalorder %s12, 0
      %p105 = por %p103, %p104
      %p106 = scmp.ne.s32.totalorder %s95, %s98
      %p107 = scmp.eq.s32.totalorder %s17, 3
      %p108 = por %p106, %p107
      %p109 = scmp.ne.s32.totalorder %s98, %s99
      %p110 = scmp.eq.s32.totalorder %s17, 0
      %p111 = por %p109, %p110
      %p112 = scmp.ne.s32.totalorder %s98, %s99
      %p113 = scmp.eq.s32.totalorder %s18, 3
      %p114 = por %p112, %p113
      %p116 = scmp.ne.s32.totalorder %s99, %s115
      %p117 = scmp.eq.s32.totalorder %s18, 0
      %p118 = por %p116, %p117
      %s120 = sadd.s32 %s119, 1
      %p123 = scmp.eq.s32.totalorder %s12, 3
      %p124 = scmp.ne.s32.totalorder %s119, %s121
      %p125 = scmp.eq.s32.totalorder %s12, 0
      %p126 = por %p124, %p125
      %p127 = scmp.ne.s32.totalorder %s119, %s121
      %p128 = scmp.eq.s32.totalorder %s17, 3
      %p129 = por %p127, %p128
      %p130 = scmp.ne.s32.totalorder %s121, %s122
      %p131 = scmp.eq.s32.totalorder %s17, 0
      %p132 = por %p130, %p131
      %p133 = scmp.ne.s32.totalorder %s121, %s122
      %p134 = scmp.eq.s32.totalorder %s18, 3
      %p135 = por %p133, %p134
      %p137 = scmp.ne.s32.totalorder %s122, %s136
      %p138 = scmp.eq.s32.totalorder %s18, 0
      %p139 = por %p137, %p138
      %s141 = sadd.s32 %s140, 1
      %p144 = scmp.eq.s32.totalorder %s12, 3
      %p145 = scmp.ne.s32.totalorder %s140, %s142
      %p146 = scmp.eq.s32.totalorder %s12, 0
      %p147 = por %p145, %p146
      %p148 = scmp.ne.s32.totalorder %s140, %s142
      %p149 = scmp.eq.s32.totalorder %s17, 3
      %p150 = por %p148, %p149
      %p151 = scmp.ne.s32.totalorder %s142, %s143
      %p152 = scmp.eq.s32.totalorder %s17, 0
      %p153 = por %p151, %p152
      %p154 = scmp.ne.s32.totalorder %s142, %s143
      %p155 = scmp.eq.s32.totalorder %s18, 3
      %p156 = por %p154, %p155
      %p158 = scmp.ne.s32.totalorder %s143, %s157
      %p159 = scmp.eq.s32.totalorder %s18, 0
      %p160 = por %p158, %p159
      %s162 = sadd.s32 %s161, 1
      %p165 = scmp.eq.s32.totalorder %s12, 3
      %p166 = scmp.ne.s32.totalorder %s161, %s163
      %p167 = scmp.eq.s32.totalorder %s12, 0
      %p168 = por %p166, %p167
      %p169 = scmp.ne.s32.totalorder %s161, %s163
      %p170 = scmp.eq.s32.totalorder %s17, 3
      %p171 = por %p169, %p170
      %p172 = scmp.ne.s32.totalorder %s163, %s164
      %p173 = scmp.eq.s32.totalorder %s17, 0
      %p174 = por %p172, %p173
      %p175 = scmp.ne.s32.totalorder %s163, %s164
      %p176 = scmp.eq.s32.totalorder %s18, 3
      %p177 = por %p175, %p176
      %p179 = scmp.ne.s32.totalorder %s164, %s178
      %p180 = scmp.eq.s32.totalorder %s18, 0
      %p181 = por %p179, %p180
      %p182 = scmp.le.s32.totalorder 1, %s12
      %p183 = scmp.lt.s32.totalorder %s12, 5
      %p184 = pnand %p182, %p183
      %p185 = pneg %p184
      // Predicated region
      $region9: #{tsn_forward.1} parent=5 // pred_check
        _
      $region10: #{tsn_forward.1} parent=5 // pred_check_branch
        %187 = sbr.rel (%p184) target = $region12
      $region11: #{tsn_forward.1} parent=5 // pred_region
        %s188 = ssub.s32 %s12, 1
        // Predicated region
        $region13: #{tsn_forward.1} parent=11 // pred_check
          %p189 = pneg %p33
        $region14: #{tsn_forward.1} parent=11 // pred_check_branch
          %191 = sbr.rel (%p189) target = $region16
        $region15: #{tsn_forward.1} parent=11 // pred_region
          _
        $region16: #{tsn_forward.1} parent=11 // pred_fallthru
          _
        // Predicated region
        $region17: #{tsn_forward.1} parent=11 // pred_check
          %p192 = pneg %p132
        $region18: #{tsn_forward.1} parent=11 // pred_check_branch
          %194 = sbr.rel (%p192) target = $region20
        $region19: #{tsn_forward.1} parent=11 // pred_region
          _
        $region20: #{tsn_forward.1} parent=11 // pred_fallthru
          _
        // Predicated region
        $region21: #{tsn_forward.1} parent=11 // pred_check
          %p195 = pneg %p153
        $region22: #{tsn_forward.1} parent=11 // pred_check_branch
          %197 = sbr.rel (%p195) target = $region24
        $region23: #{tsn_forward.1} parent=11 // pred_region
          _
        $region24: #{tsn_forward.1} parent=11 // pred_fallthru
          _
      $region12: #{tsn_forward.1} parent=5 // pred_fallthru
        _
      %p198 = scmp.lt.s32.totalorder %s12, 4
      // Predicated region
      $region25: #{tsn_forward.1} parent=5 // pred_check
        %p199 = pneg %p198
      $region26: #{tsn_forward.1} parent=5 // pred_check_branch
        %201 = sbr.rel (%p199) target = $region28
      $region27: #{tsn_forward.1} parent=5 // pred_region
        // Predicated region
        $region29: #{tsn_forward.1} parent=27 // pred_check
          %p202 = pneg %p53
        $region30: #{tsn_forward.1} parent=27 // pred_check_branch
          %204 = sbr.rel (%p202) target = $region32
        $region31: #{tsn_forward.1} parent=27 // pred_region
          %s205 = sand.u32 %s43, 1
          %s206 = sand.u32 %s43, 1
          %s207 = smul.addr %s206, 1536
          %s208 = scalar_lea.vmem [#allocation3], %s207
          %s209 = smul.u32 4, %s12
          %s210 = smul.addr %s209, 4
          %s211 = scalar_lea.vmem %s1, %s210
          // Predicated region
          $region33: #{tsn_forward.1} parent=31 // pred_check
            _
          $region34: #{tsn_forward.1} parent=31 // pred_check_branch
            %213 = sbr.rel (0) target = $region36
          $region35: #{tsn_forward.1} parent=31 // pred_region
            // Predicated region
            $region37: #{tsn_forward.1} parent=35 // pred_check
              _
            $region38: #{tsn_forward.1} parent=35 // pred_check_branch
              %215 = sbr.rel (0) target = $region40
            $region39: #{tsn_forward.1} parent=35 // pred_region
              loop: start=0, step=1, limit=1
              $region41: #{tsn_forward.1} parent=39 // loop_pre_header
                _
              $region42: #{tsn_forward.1} parent=39 // loop_header
                %s217 = sphi 0, %s221
                %p218 = scmp.ge.s32.totalorder %s217, 1
                %s222 = sphi %s211, %s211
                %s223 = sphi %s208, %s208
              $region43: #{tsn_forward.1} parent=39 // loop_header_branch
                %220 = sbr.rel (%p218) target = $region47
              $region44: #{tsn_forward.1} parent=39 // loop_body
                %v224 = vld [vmem:[%s222] sm:$0xff]
                %225 = vst [vmem:[%s223] sm:$0xff] %v224
                %v226 = vld [vmem:[%s222 + $0x8] sm:$0xff]
                %227 = vst [vmem:[%s223 + $0x8] sm:$0xff] %v226
                %v228 = vld [vmem:[%s222 + $0x40] sm:$0xff]
                %229 = vst [vmem:[%s223 + $0x10] sm:$0xff] %v228
                %v230 = vld [vmem:[%s222 + $0x48] sm:$0xff]
                %231 = vst [vmem:[%s223 + $0x18] sm:$0xff] %v230
                %v232 = vld [vmem:[%s222 + $0x80] sm:$0xff]
                %233 = vst [vmem:[%s223 + $0x20] sm:$0xff] %v232
                %v234 = vld [vmem:[%s222 + $0x88] sm:$0xff]
                %235 = vst [vmem:[%s223 + $0x28] sm:$0xff] %v234
                %v236 = vld [vmem:[%s222 + $0xc0] sm:$0xff]
                %237 = vst [vmem:[%s223 + $0x30] sm:$0xff] %v236
                %v238 = vld [vmem:[%s222 + $0xc8] sm:$0xff]
                %239 = vst [vmem:[%s223 + $0x38] sm:$0xff] %v238
                %v240 = vld [vmem:[%s222 + $0x100] sm:$0xff]
                %241 = vst [vmem:[%s223 + $0x40] sm:$0xff] %v240
                %v242 = vld [vmem:[%s222 + $0x108] sm:$0xff]
                %243 = vst [vmem:[%s223 + $0x48] sm:$0xff] %v242
                %v244 = vld [vmem:[%s222 + $0x140] sm:$0xff]
                %245 = vst [vmem:[%s223 + $0x50] sm:$0xff] %v244
                %v246 = vld [vmem:[%s222 + $0x148] sm:$0xff]
                %247 = vst [vmem:[%s223 + $0x58] sm:$0xff] %v246
                %v248 = vld [vmem:[%s222 + $0x180] sm:$0xff]
                %249 = vst [vmem:[%s223 + $0x60] sm:$0xff] %v248
                %v250 = vld [vmem:[%s222 + $0x188] sm:$0xff]
                %251 = vst [vmem:[%s223 + $0x68] sm:$0xff] %v250
                %v252 = vld [vmem:[%s222 + $0x1c0] sm:$0xff]
                %253 = vst [vmem:[%s223 + $0x70] sm:$0xff] %v252
                %v254 = vld [vmem:[%s222 + $0x1c8] sm:$0xff]
                %255 = vst [vmem:[%s223 + $0x78] sm:$0xff] %v254
                %v256 = vld [vmem:[%s222 + $0x200] sm:$0xff]
                %257 = vst [vmem:[%s223 + $0x80] sm:$0xff] %v256
                %v258 = vld [vmem:[%s222 + $0x208] sm:$0xff]
                %259 = vst [vmem:[%s223 + $0x88] sm:$0xff] %v258
                %v260 = vld [vmem:[%s222 + $0x240] sm:$0xff]
                %261 = vst [vmem:[%s223 + $0x90] sm:$0xff] %v260
                %v262 = vld [vmem:[%s222 + $0x248] sm:$0xff]
                %263 = vst [vmem:[%s223 + $0x98] sm:$0xff] %v262
                %v264 = vld [vmem:[%s222 + $0x280] sm:$0xff]
                %265 = vst [vmem:[%s223 + $0xa0] sm:$0xff] %v264
                %v266 = vld [vmem:[%s222 + $0x288] sm:$0xff]
                %267 = vst [vmem:[%s223 + $0xa8] sm:$0xff] %v266
                %v268 = vld [vmem:[%s222 + $0x2c0] sm:$0xff]
                %269 = vst [vmem:[%s223 + $0xb0] sm:$0xff] %v268
                %v270 = vld [vmem:[%s222 + $0x2c8] sm:$0xff]
                %271 = vst [vmem:[%s223 + $0xb8] sm:$0xff] %v270
                %v272 = vld [vmem:[%s222 + $0x300] sm:$0xff]
                %273 = vst [vmem:[%s223 + $0xc0] sm:$0xff] %v272
                %v274 = vld [vmem:[%s222 + $0x308] sm:$0xff]
                %275 = vst [vmem:[%s223 + $0xc8] sm:$0xff] %v274
                %v276 = vld [vmem:[%s222 + $0x340] sm:$0xff]
                %277 = vst [vmem:[%s223 + $0xd0] sm:$0xff] %v276
                %v278 = vld [vmem:[%s222 + $0x348] sm:$0xff]
                %279 = vst [vmem:[%s223 + $0xd8] sm:$0xff] %v278
                %v280 = vld [vmem:[%s222 + $0x380] sm:$0xff]
                %281 = vst [vmem:[%s223 + $0xe0] sm:$0xff] %v280
                %v282 = vld [vmem:[%s222 + $0x388] sm:$0xff]
                %283 = vst [vmem:[%s223 + $0xe8] sm:$0xff] %v282
                %v284 = vld [vmem:[%s222 + $0x3c0] sm:$0xff]
                %285 = vst [vmem:[%s223 + $0xf0] sm:$0xff] %v284
                %v286 = vld [vmem:[%s222 + $0x3c8] sm:$0xff]
                %287 = vst [vmem:[%s223 + $0xf8] sm:$0xff] %v286
                %v288 = vld [vmem:[%s222 + $0x400] sm:$0xff]
                %289 = vst [vmem:[%s223 + $0x100] sm:$0xff] %v288
                %v290 = vld [vmem:[%s222 + $0x408] sm:$0xff]
                %291 = vst [vmem:[%s223 + $0x108] sm:$0xff] %v290
                %v292 = vld [vmem:[%s222 + $0x440] sm:$0xff]
                %293 = vst [vmem:[%s223 + $0x110] sm:$0xff] %v292
                %v294 = vld [vmem:[%s222 + $0x448] sm:$0xff]
                %295 = vst [vmem:[%s223 + $0x118] sm:$0xff] %v294
                %v296 = vld [vmem:[%s222 + $0x480] sm:$0xff]
                %297 = vst [vmem:[%s223 + $0x120] sm:$0xff] %v296
                %v298 = vld [vmem:[%s222 + $0x488] sm:$0xff]
                %299 = vst [vmem:[%s223 + $0x128] sm:$0xff] %v298
                %v300 = vld [vmem:[%s222 + $0x4c0] sm:$0xff]
                %301 = vst [vmem:[%s223 + $0x130] sm:$0xff] %v300
                %v302 = vld [vmem:[%s222 + $0x4c8] sm:$0xff]
                %303 = vst [vmem:[%s223 + $0x138] sm:$0xff] %v302
                %v304 = vld [vmem:[%s222 + $0x500] sm:$0xff]
                %305 = vst [vmem:[%s223 + $0x140] sm:$0xff] %v304
                %v306 = vld [vmem:[%s222 + $0x508] sm:$0xff]
                %307 = vst [vmem:[%s223 + $0x148] sm:$0xff] %v306
                %v308 = vld [vmem:[%s222 + $0x540] sm:$0xff]
                %309 = vst [vmem:[%s223 + $0x150] sm:$0xff] %v308
                %v310 = vld [vmem:[%s222 + $0x548] sm:$0xff]
                %311 = vst [vmem:[%s223 + $0x158] sm:$0xff] %v310
                %v312 = vld [vmem:[%s222 + $0x580] sm:$0xff]
                %313 = vst [vmem:[%s223 + $0x160] sm:$0xff] %v312
                %v314 = vld [vmem:[%s222 + $0x588] sm:$0xff]
                %315 = vst [vmem:[%s223 + $0x168] sm:$0xff] %v314
                %v316 = vld [vmem:[%s222 + $0x5c0] sm:$0xff]
                %317 = vst [vmem:[%s223 + $0x170] sm:$0xff] %v316
                %v318 = vld [vmem:[%s222 + $0x5c8] sm:$0xff]
                %319 = vst [vmem:[%s223 + $0x178] sm:$0xff] %v318
                %v320 = vld [vmem:[%s222 + $0x600] sm:$0xff]
                %321 = vst [vmem:[%s223 + $0x180] sm:$0xff] %v320
                %v322 = vld [vmem:[%s222 + $0x608] sm:$0xff]
                %323 = vst [vmem:[%s223 + $0x188] sm:$0xff] %v322
                %v324 = vld [vmem:[%s222 + $0x640] sm:$0xff]
                %325 = vst [vmem:[%s223 + $0x190] sm:$0xff] %v324
                %v326 = vld [vmem:[%s222 + $0x648] sm:$0xff]
                %327 = vst [vmem:[%s223 + $0x198] sm:$0xff] %v326
                %v328 = vld [vmem:[%s222 + $0x680] sm:$0xff]
                %329 = vst [vmem:[%s223 + $0x1a0] sm:$0xff] %v328
                %v330 = vld [vmem:[%s222 + $0x688] sm:$0xff]
                %331 = vst [vmem:[%s223 + $0x1a8] sm:$0xff] %v330
                %v332 = vld [vmem:[%s222 + $0x6c0] sm:$0xff]
                %333 = vst [vmem:[%s223 + $0x1b0] sm:$0xff] %v332
                %v334 = vld [vmem:[%s222 + $0x6c8] sm:$0xff]
                %335 = vst [vmem:[%s223 + $0x1b8] sm:$0xff] %v334
                %v336 = vld [vmem:[%s222 + $0x700] sm:$0xff]
                %337 = vst [vmem:[%s223 + $0x1c0] sm:$0xff] %v336
                %v338 = vld [vmem:[%s222 + $0x708] sm:$0xff]
                %339 = vst [vmem:[%s223 + $0x1c8] sm:$0xff] %v338
                %v340 = vld [vmem:[%s222 + $0x740] sm:$0xff]
                %341 = vst [vmem:[%s223 + $0x1d0] sm:$0xff] %v340
                %v342 = vld [vmem:[%s222 + $0x748] sm:$0xff]
                %343 = vst [vmem:[%s223 + $0x1d8] sm:$0xff] %v342
                %v344 = vld [vmem:[%s222 + $0x780] sm:$0xff]
                %345 = vst [vmem:[%s223 + $0x1e0] sm:$0xff] %v344
                %v346 = vld [vmem:[%s222 + $0x788] sm:$0xff]
                %347 = vst [vmem:[%s223 + $0x1e8] sm:$0xff] %v346
                %v348 = vld [vmem:[%s222 + $0x7c0] sm:$0xff]
                %349 = vst [vmem:[%s223 + $0x1f0] sm:$0xff] %v348
                %v350 = vld [vmem:[%s222 + $0x7c8] sm:$0xff]
                %351 = vst [vmem:[%s223 + $0x1f8] sm:$0xff] %v350
                %v352 = vld [vmem:[%s222 + $0x800] sm:$0xff]
                %353 = vst [vmem:[%s223 + $0x200] sm:$0xff] %v352
                %v354 = vld [vmem:[%s222 + $0x808] sm:$0xff]
                %355 = vst [vmem:[%s223 + $0x208] sm:$0xff] %v354
                %v356 = vld [vmem:[%s222 + $0x840] sm:$0xff]
                %357 = vst [vmem:[%s223 + $0x210] sm:$0xff] %v356
                %v358 = vld [vmem:[%s222 + $0x848] sm:$0xff]
                %359 = vst [vmem:[%s223 + $0x218] sm:$0xff] %v358
                %v360 = vld [vmem:[%s222 + $0x880] sm:$0xff]
                %361 = vst [vmem:[%s223 + $0x220] sm:$0xff] %v360
                %v362 = vld [vmem:[%s222 + $0x888] sm:$0xff]
                %363 = vst [vmem:[%s223 + $0x228] sm:$0xff] %v362
                %v364 = vld [vmem:[%s222 + $0x8c0] sm:$0xff]
                %365 = vst [vmem:[%s223 + $0x230] sm:$0xff] %v364
                %v366 = vld [vmem:[%s222 + $0x8c8] sm:$0xff]
                %367 = vst [vmem:[%s223 + $0x238] sm:$0xff] %v366
                %v368 = vld [vmem:[%s222 + $0x900] sm:$0xff]
                %369 = vst [vmem:[%s223 + $0x240] sm:$0xff] %v368
                %v370 = vld [vmem:[%s222 + $0x908] sm:$0xff]
                %371 = vst [vmem:[%s223 + $0x248] sm:$0xff] %v370
                %v372 = vld [vmem:[%s222 + $0x940] sm:$0xff]
                %373 = vst [vmem:[%s223 + $0x250] sm:$0xff] %v372
                %v374 = vld [vmem:[%s222 + $0x948] sm:$0xff]
                %375 = vst [vmem:[%s223 + $0x258] sm:$0xff] %v374
                %v376 = vld [vmem:[%s222 + $0x980] sm:$0xff]
                %377 = vst [vmem:[%s223 + $0x260] sm:$0xff] %v376
                %v378 = vld [vmem:[%s222 + $0x988] sm:$0xff]
                %379 = vst [vmem:[%s223 + $0x268] sm:$0xff] %v378
                %v380 = vld [vmem:[%s222 + $0x9c0] sm:$0xff]
                %381 = vst [vmem:[%s223 + $0x270] sm:$0xff] %v380
                %v382 = vld [vmem:[%s222 + $0x9c8] sm:$0xff]
                %383 = vst [vmem:[%s223 + $0x278] sm:$0xff] %v382
                %v384 = vld [vmem:[%s222 + $0xa00] sm:$0xff]
                %385 = vst [vmem:[%s223 + $0x280] sm:$0xff] %v384
                %v386 = vld [vmem:[%s222 + $0xa08] sm:$0xff]
                %387 = vst [vmem:[%s223 + $0x288] sm:$0xff] %v386
                %v388 = vld [vmem:[%s222 + $0xa40] sm:$0xff]
                %389 = vst [vmem:[%s223 + $0x290] sm:$0xff] %v388
                %v390 = vld [vmem:[%s222 + $0xa48] sm:$0xff]
                %391 = vst [vmem:[%s223 + $0x298] sm:$0xff] %v390
                %v392 = vld [vmem:[%s222 + $0xa80] sm:$0xff]
                %393 = vst [vmem:[%s223 + $0x2a0] sm:$0xff] %v392
                %v394 = vld [vmem:[%s222 + $0xa88] sm:$0xff]
                %395 = vst [vmem:[%s223 + $0x2a8] sm:$0xff] %v394
                %v396 = vld [vmem:[%s222 + $0xac0] sm:$0xff]
                %397 = vst [vmem:[%s223 + $0x2b0] sm:$0xff] %v396
                %v398 = vld [vmem:[%s222 + $0xac8] sm:$0xff]
                %399 = vst [vmem:[%s223 + $0x2b8] sm:$0xff] %v398
                %v400 = vld [vmem:[%s222 + $0xb00] sm:$0xff]
                %401 = vst [vmem:[%s223 + $0x2c0] sm:$0xff] %v400
                %v402 = vld [vmem:[%s222 + $0xb08] sm:$0xff]
                %403 = vst [vmem:[%s223 + $0x2c8] sm:$0xff] %v402
                %v404 = vld [vmem:[%s222 + $0xb40] sm:$0xff]
                %405 = vst [vmem:[%s223 + $0x2d0] sm:$0xff] %v404
                %v406 = vld [vmem:[%s222 + $0xb48] sm:$0xff]
                %407 = vst [vmem:[%s223 + $0x2d8] sm:$0xff] %v406
                %v408 = vld [vmem:[%s222 + $0xb80] sm:$0xff]
                %409 = vst [vmem:[%s223 + $0x2e0] sm:$0xff] %v408
                %v410 = vld [vmem:[%s222 + $0xb88] sm:$0xff]
                %411 = vst [vmem:[%s223 + $0x2e8] sm:$0xff] %v410
                %v412 = vld [vmem:[%s222 + $0xbc0] sm:$0xff]
                %413 = vst [vmem:[%s223 + $0x2f0] sm:$0xff] %v412
                %v414 = vld [vmem:[%s222 + $0xbc8] sm:$0xff]
                %415 = vst [vmem:[%s223 + $0x2f8] sm:$0xff] %v414
                %v416 = vld [vmem:[%s222 + $0xc00] sm:$0xff]
                %417 = vst [vmem:[%s223 + $0x300] sm:$0xff] %v416
                %v418 = vld [vmem:[%s222 + $0xc08] sm:$0xff]
                %419 = vst [vmem:[%s223 + $0x308] sm:$0xff] %v418
                %v420 = vld [vmem:[%s222 + $0xc40] sm:$0xff]
                %421 = vst [vmem:[%s223 + $0x310] sm:$0xff] %v420
                %v422 = vld [vmem:[%s222 + $0xc48] sm:$0xff]
                %423 = vst [vmem:[%s223 + $0x318] sm:$0xff] %v422
                %v424 = vld [vmem:[%s222 + $0xc80] sm:$0xff]
                %425 = vst [vmem:[%s223 + $0x320] sm:$0xff] %v424
                %v426 = vld [vmem:[%s222 + $0xc88] sm:$0xff]
                %427 = vst [vmem:[%s223 + $0x328] sm:$0xff] %v426
                %v428 = vld [vmem:[%s222 + $0xcc0] sm:$0xff]
                %429 = vst [vmem:[%s223 + $0x330] sm:$0xff] %v428
                %v430 = vld [vmem:[%s222 + $0xcc8] sm:$0xff]
                %431 = vst [vmem:[%s223 + $0x338] sm:$0xff] %v430
                %v432 = vld [vmem:[%s222 + $0xd00] sm:$0xff]
                %433 = vst [vmem:[%s223 + $0x340] sm:$0xff] %v432
                %v434 = vld [vmem:[%s222 + $0xd08] sm:$0xff]
                %435 = vst [vmem:[%s223 + $0x348] sm:$0xff] %v434
                %v436 = vld [vmem:[%s222 + $0xd40] sm:$0xff]
                %437 = vst [vmem:[%s223 + $0x350] sm:$0xff] %v436
                %v438 = vld [vmem:[%s222 + $0xd48] sm:$0xff]
                %439 = vst [vmem:[%s223 + $0x358] sm:$0xff] %v438
                %v440 = vld [vmem:[%s222 + $0xd80] sm:$0xff]
                %441 = vst [vmem:[%s223 + $0x360] sm:$0xff] %v440
                %v442 = vld [vmem:[%s222 + $0xd88] sm:$0xff]
                %443 = vst [vmem:[%s223 + $0x368] sm:$0xff] %v442
                %v444 = vld [vmem:[%s222 + $0xdc0] sm:$0xff]
                %445 = vst [vmem:[%s223 + $0x370] sm:$0xff] %v444
                %v446 = vld [vmem:[%s222 + $0xdc8] sm:$0xff]
                %447 = vst [vmem:[%s223 + $0x378] sm:$0xff] %v446
                %v448 = vld [vmem:[%s222 + $0xe00] sm:$0xff]
                %449 = vst [vmem:[%s223 + $0x380] sm:$0xff] %v448
                %v450 = vld [vmem:[%s222 + $0xe08] sm:$0xff]
                %451 = vst [vmem:[%s223 + $0x388] sm:$0xff] %v450
                %v452 = vld [vmem:[%s222 + $0xe40] sm:$0xff]
                %453 = vst [vmem:[%s223 + $0x390] sm:$0xff] %v452
                %v454 = vld [vmem:[%s222 + $0xe48] sm:$0xff]
                %455 = vst [vmem:[%s223 + $0x398] sm:$0xff] %v454
                %v456 = vld [vmem:[%s222 + $0xe80] sm:$0xff]
                %457 = vst [vmem:[%s223 + $0x3a0] sm:$0xff] %v456
                %v458 = vld [vmem:[%s222 + $0xe88] sm:$0xff]
                %459 = vst [vmem:[%s223 + $0x3a8] sm:$0xff] %v458
                %v460 = vld [vmem:[%s222 + $0xec0] sm:$0xff]
                %461 = vst [vmem:[%s223 + $0x3b0] sm:$0xff] %v460
                %v462 = vld [vmem:[%s222 + $0xec8] sm:$0xff]
                %463 = vst [vmem:[%s223 + $0x3b8] sm:$0xff] %v462
                %v464 = vld [vmem:[%s222 + $0xf00] sm:$0xff]
                %465 = vst [vmem:[%s223 + $0x3c0] sm:$0xff] %v464
                %v466 = vld [vmem:[%s222 + $0xf08] sm:$0xff]
                %467 = vst [vmem:[%s223 + $0x3c8] sm:$0xff] %v466
                %v468 = vld [vmem:[%s222 + $0xf40] sm:$0xff]
                %469 = vst [vmem:[%s223 + $0x3d0] sm:$0xff] %v468
                %v470 = vld [vmem:[%s222 + $0xf48] sm:$0xff]
                %471 = vst [vmem:[%s223 + $0x3d8] sm:$0xff] %v470
                %v472 = vld [vmem:[%s222 + $0xf80] sm:$0xff]
                %473 = vst [vmem:[%s223 + $0x3e0] sm:$0xff] %v472
                %v474 = vld [vmem:[%s222 + $0xf88] sm:$0xff]
                %475 = vst [vmem:[%s223 + $0x3e8] sm:$0xff] %v474
                %v476 = vld [vmem:[%s222 + $0xfc0] sm:$0xff]
                %477 = vst [vmem:[%s223 + $0x3f0] sm:$0xff] %v476
                %v478 = vld [vmem:[%s222 + $0xfc8] sm:$0xff]
                %479 = vst [vmem:[%s223 + $0x3f8] sm:$0xff] %v478
                %v480 = vld [vmem:[%s222 + $0x1000] sm:$0xff]
                %481 = vst [vmem:[%s223 + $0x400] sm:$0xff] %v480
                %v482 = vld [vmem:[%s222 + $0x1008] sm:$0xff]
                %483 = vst [vmem:[%s223 + $0x408] sm:$0xff] %v482
                %v484 = vld [vmem:[%s222 + $0x1040] sm:$0xff]
                %485 = vst [vmem:[%s223 + $0x410] sm:$0xff] %v484
                %v486 = vld [vmem:[%s222 + $0x1048] sm:$0xff]
                %487 = vst [vmem:[%s223 + $0x418] sm:$0xff] %v486
                %v488 = vld [vmem:[%s222 + $0x1080] sm:$0xff]
                %489 = vst [vmem:[%s223 + $0x420] sm:$0xff] %v488
                %v490 = vld [vmem:[%s222 + $0x1088] sm:$0xff]
                %491 = vst [vmem:[%s223 + $0x428] sm:$0xff] %v490
                %v492 = vld [vmem:[%s222 + $0x10c0] sm:$0xff]
                %493 = vst [vmem:[%s223 + $0x430] sm:$0xff] %v492
                %v494 = vld [vmem:[%s222 + $0x10c8] sm:$0xff]
                %495 = vst [vmem:[%s223 + $0x438] sm:$0xff] %v494
                %v496 = vld [vmem:[%s222 + $0x1100] sm:$0xff]
                %497 = vst [vmem:[%s223 + $0x440] sm:$0xff] %v496
                %v498 = vld [vmem:[%s222 + $0x1108] sm:$0xff]
                %499 = vst [vmem:[%s223 + $0x448] sm:$0xff] %v498
                %v500 = vld [vmem:[%s222 + $0x1140] sm:$0xff]
                %501 = vst [vmem:[%s223 + $0x450] sm:$0xff] %v500
                %v502 = vld [vmem:[%s222 + $0x1148] sm:$0xff]
                %503 = vst [vmem:[%s223 + $0x458] sm:$0xff] %v502
                %v504 = vld [vmem:[%s222 + $0x1180] sm:$0xff]
                %505 = vst [vmem:[%s223 + $0x460] sm:$0xff] %v504
                %v506 = vld [vmem:[%s222 + $0x1188] sm:$0xff]
                %507 = vst [vmem:[%s223 + $0x468] sm:$0xff] %v506
                %v508 = vld [vmem:[%s222 + $0x11c0] sm:$0xff]
                %509 = vst [vmem:[%s223 + $0x470] sm:$0xff] %v508
                %v510 = vld [vmem:[%s222 + $0x11c8] sm:$0xff]
                %511 = vst [vmem:[%s223 + $0x478] sm:$0xff] %v510
                %v512 = vld [vmem:[%s222 + $0x1200] sm:$0xff]
                %513 = vst [vmem:[%s223 + $0x480] sm:$0xff] %v512
                %v514 = vld [vmem:[%s222 + $0x1208] sm:$0xff]
                %515 = vst [vmem:[%s223 + $0x488] sm:$0xff] %v514
                %v516 = vld [vmem:[%s222 + $0x1240] sm:$0xff]
                %517 = vst [vmem:[%s223 + $0x490] sm:$0xff] %v516
                %v518 = vld [vmem:[%s222 + $0x1248] sm:$0xff]
                %519 = vst [vmem:[%s223 + $0x498] sm:$0xff] %v518
                %v520 = vld [vmem:[%s222 + $0x1280] sm:$0xff]
                %521 = vst [vmem:[%s223 + $0x4a0] sm:$0xff] %v520
                %v522 = vld [vmem:[%s222 + $0x1288] sm:$0xff]
                %523 = vst [vmem:[%s223 + $0x4a8] sm:$0xff] %v522
                %v524 = vld [vmem:[%s222 + $0x12c0] sm:$0xff]
                %525 = vst [vmem:[%s223 + $0x4b0] sm:$0xff] %v524
                %v526 = vld [vmem:[%s222 + $0x12c8] sm:$0xff]
                %527 = vst [vmem:[%s223 + $0x4b8] sm:$0xff] %v526
                %v528 = vld [vmem:[%s222 + $0x1300] sm:$0xff]
                %529 = vst [vmem:[%s223 + $0x4c0] sm:$0xff] %v528
                %v530 = vld [vmem:[%s222 + $0x1308] sm:$0xff]
                %531 = vst [vmem:[%s223 + $0x4c8] sm:$0xff] %v530
                %v532 = vld [vmem:[%s222 + $0x1340] sm:$0xff]
                %533 = vst [vmem:[%s223 + $0x4d0] sm:$0xff] %v532
                %v534 = vld [vmem:[%s222 + $0x1348] sm:$0xff]
                %535 = vst [vmem:[%s223 + $0x4d8] sm:$0xff] %v534
                %v536 = vld [vmem:[%s222 + $0x1380] sm:$0xff]
                %537 = vst [vmem:[%s223 + $0x4e0] sm:$0xff] %v536
                %v538 = vld [vmem:[%s222 + $0x1388] sm:$0xff]
                %539 = vst [vmem:[%s223 + $0x4e8] sm:$0xff] %v538
                %v540 = vld [vmem:[%s222 + $0x13c0] sm:$0xff]
                %541 = vst [vmem:[%s223 + $0x4f0] sm:$0xff] %v540
                %v542 = vld [vmem:[%s222 + $0x13c8] sm:$0xff]
                %543 = vst [vmem:[%s223 + $0x4f8] sm:$0xff] %v542
                %v544 = vld [vmem:[%s222 + $0x1400] sm:$0xff]
                %545 = vst [vmem:[%s223 + $0x500] sm:$0xff] %v544
                %v546 = vld [vmem:[%s222 + $0x1408] sm:$0xff]
                %547 = vst [vmem:[%s223 + $0x508] sm:$0xff] %v546
                %v548 = vld [vmem:[%s222 + $0x1440] sm:$0xff]
                %549 = vst [vmem:[%s223 + $0x510] sm:$0xff] %v548
                %v550 = vld [vmem:[%s222 + $0x1448] sm:$0xff]
                %551 = vst [vmem:[%s223 + $0x518] sm:$0xff] %v550
                %v552 = vld [vmem:[%s222 + $0x1480] sm:$0xff]
                %553 = vst [vmem:[%s223 + $0x520] sm:$0xff] %v552
                %v554 = vld [vmem:[%s222 + $0x1488] sm:$0xff]
                %555 = vst [vmem:[%s223 + $0x528] sm:$0xff] %v554
                %v556 = vld [vmem:[%s222 + $0x14c0] sm:$0xff]
                %557 = vst [vmem:[%s223 + $0x530] sm:$0xff] %v556
                %v558 = vld [vmem:[%s222 + $0x14c8] sm:$0xff]
                %559 = vst [vmem:[%s223 + $0x538] sm:$0xff] %v558
                %v560 = vld [vmem:[%s222 + $0x1500] sm:$0xff]
                %561 = vst [vmem:[%s223 + $0x540] sm:$0xff] %v560
                %v562 = vld [vmem:[%s222 + $0x1508] sm:$0xff]
                %563 = vst [vmem:[%s223 + $0x548] sm:$0xff] %v562
                %v564 = vld [vmem:[%s222 + $0x1540] sm:$0xff]
                %565 = vst [vmem:[%s223 + $0x550] sm:$0xff] %v564
                %v566 = vld [vmem:[%s222 + $0x1548] sm:$0xff]
                %567 = vst [vmem:[%s223 + $0x558] sm:$0xff] %v566
                %v568 = vld [vmem:[%s222 + $0x1580] sm:$0xff]
                %569 = vst [vmem:[%s223 + $0x560] sm:$0xff] %v568
                %v570 = vld [vmem:[%s222 + $0x1588] sm:$0xff]
                %571 = vst [vmem:[%s223 + $0x568] sm:$0xff] %v570
                %v572 = vld [vmem:[%s222 + $0x15c0] sm:$0xff]
                %573 = vst [vmem:[%s223 + $0x570] sm:$0xff] %v572
                %v574 = vld [vmem:[%s222 + $0x15c8] sm:$0xff]
                %575 = vst [vmem:[%s223 + $0x578] sm:$0xff] %v574
                %v576 = vld [vmem:[%s222 + $0x1600] sm:$0xff]
                %577 = vst [vmem:[%s223 + $0x580] sm:$0xff] %v576
                %v578 = vld [vmem:[%s222 + $0x1608] sm:$0xff]
                %579 = vst [vmem:[%s223 + $0x588] sm:$0xff] %v578
                %v580 = vld [vmem:[%s222 + $0x1640] sm:$0xff]
                %581 = vst [vmem:[%s223 + $0x590] sm:$0xff] %v580
                %v582 = vld [vmem:[%s222 + $0x1648] sm:$0xff]
                %583 = vst [vmem:[%s223 + $0x598] sm:$0xff] %v582
                %v584 = vld [vmem:[%s222 + $0x1680] sm:$0xff]
                %585 = vst [vmem:[%s223 + $0x5a0] sm:$0xff] %v584
                %v586 = vld [vmem:[%s222 + $0x1688] sm:$0xff]
                %587 = vst [vmem:[%s223 + $0x5a8] sm:$0xff] %v586
                %v588 = vld [vmem:[%s222 + $0x16c0] sm:$0xff]
                %589 = vst [vmem:[%s223 + $0x5b0] sm:$0xff] %v588
                %v590 = vld [vmem:[%s222 + $0x16c8] sm:$0xff]
                %591 = vst [vmem:[%s223 + $0x5b8] sm:$0xff] %v590
                %v592 = vld [vmem:[%s222 + $0x1700] sm:$0xff]
                %593 = vst [vmem:[%s223 + $0x5c0] sm:$0xff] %v592
                %v594 = vld [vmem:[%s222 + $0x1708] sm:$0xff]
                %595 = vst [vmem:[%s223 + $0x5c8] sm:$0xff] %v594
                %v596 = vld [vmem:[%s222 + $0x1740] sm:$0xff]
                %597 = vst [vmem:[%s223 + $0x5d0] sm:$0xff] %v596
                %v598 = vld [vmem:[%s222 + $0x1748] sm:$0xff]
                %599 = vst [vmem:[%s223 + $0x5d8] sm:$0xff] %v598
                %v600 = vld [vmem:[%s222 + $0x1780] sm:$0xff]
                %601 = vst [vmem:[%s223 + $0x5e0] sm:$0xff] %v600
                %v602 = vld [vmem:[%s222 + $0x1788] sm:$0xff]
                %603 = vst [vmem:[%s223 + $0x5e8] sm:$0xff] %v602
                %v604 = vld [vmem:[%s222 + $0x17c0] sm:$0xff]
                %605 = vst [vmem:[%s223 + $0x5f0] sm:$0xff] %v604
                %v606 = vld [vmem:[%s222 + $0x17c8] sm:$0xff]
                %607 = vst [vmem:[%s223 + $0x5f8] sm:$0xff] %v606
              $region45: #{tsn_forward.1} parent=39 // loop_footer
                %s221 = sadd.s32 1, %s217
              $region46: #{tsn_forward.1} parent=39 // loop_footer_branch
                %216 = sbr.rel target = $region42
              $region47: #{tsn_forward.1} parent=39 // loop_exit
                _
            $region40: #{tsn_forward.1} parent=35 // pred_fallthru
              _
            // Predicated region
            $region48: #{tsn_forward.1} parent=35 // pred_check
              _
            $region49: #{tsn_forward.1} parent=35 // pred_check_branch
              %609 = sbr.rel target = $region51
            $region50: #{tsn_forward.1} parent=35 // pred_region
              _
            $region51: #{tsn_forward.1} parent=35 // pred_fallthru
              _
          $region36: #{tsn_forward.1} parent=31 // pred_fallthru
            _
          %610 = vnop
        $region32: #{tsn_forward.1} parent=27 // pred_fallthru
          _
        // Predicated region
        $region52: #{tsn_forward.1} parent=27 // pred_check
          %p611 = pneg %p79
        $region53: #{tsn_forward.1} parent=27 // pred_check_branch
          %613 = sbr.rel (%p611) target = $region55
        $region54: #{tsn_forward.1} parent=27 // pred_region
          %s614 = smul.u32 4, %s12
          %p615 = scmp.lt.s32.totalorder %s614, 15
          %s616 = scalar_select %p615, %s614, 15
          %s617 = scalar_lea.vmem %s2, %s616
          %s618 = smul.u32 4, %s12
        $region55: #{tsn_forward.1} parent=27 // pred_fallthru
          _
        // Predicated region
        $region56: #{tsn_forward.1} parent=27 // pred_check
          %p619 = pneg %p105
        $region57: #{tsn_forward.1} parent=27 // pred_check_branch
          %621 = sbr.rel (%p619) target = $region59
        $region58: #{tsn_forward.1} parent=27 // pred_region
          %s622 = smul.u32 64, %s12
          %p623 = scmp.lt.s32.totalorder %s622, 255
          %s624 = scalar_select %p623, %s622, 255
          %s625 = smul.addr %s624, 4
          %s626 = scalar_lea.vmem %s3, %s625
          %s627 = smul.u32 64, %s12
        $region59: #{tsn_forward.1} parent=27 // pred_fallthru
          _
      $region28: #{tsn_forward.1} parent=5 // pred_fallthru
        _
      %p628 = scmp.le.s32.totalorder 1, %s12
      %p629 = scmp.lt.s32.totalorder %s12, 5
      %p630 = pnand %p628, %p629
      %p631 = pneg %p630
      // Predicated region
      $region60: #{tsn_forward.1} parent=5 // pred_check
        _
      $region61: #{tsn_forward.1} parent=5 // pred_check_branch
        %633 = sbr.rel (%p630) target = $region63
      $region62: #{tsn_forward.1} parent=5 // pred_region
        %s634 = ssub.s32 %s12, 1
        %s635 = sand.u32 %s46, 1
        %s636 = sand.u32 %s46, 1
        %s637 = smul.addr %s636, 1536
        %s638 = scalar_lea.vmem [#allocation3], %s637
        // Predicated region
        $region64: #{tsn_forward.1} parent=62 // pred_check
          %p639 = pneg %p59
        $region65: #{tsn_forward.1} parent=62 // pred_check_branch
          %641 = sbr.rel (%p639) target = $region67
        $region66: #{tsn_forward.1} parent=62 // pred_region
          _
        $region67: #{tsn_forward.1} parent=62 // pred_fallthru
          _
        %p642 = pneg %p33
        %p643 = pneg %p30
        %s644 = sand.u32 %s46, 1
        %s645 = sand.u32 %s46, 1
        %s646 = smul.addr %s645, 1536
        %s647 = scalar_lea.vmem [#allocation3], %s646
        %p648 = pneg %p59
        %p649 = pneg %p56
        %s650 = smul.u32 4, %s17
        %p651 = scmp.lt.s32.totalorder %s650, 15
        %s652 = scalar_select %p651, %s650, 15
        %s653 = scalar_lea.vmem %s2, %s652
        %p654 = pneg %p85
        %p655 = pneg %p82
        %s656 = smul.u32 64, %s17
        %p657 = scmp.lt.s32.totalorder %s656, 255
        %s658 = scalar_select %p657, %s656, 255
        %s659 = smul.addr %s658, 4
        %s660 = scalar_lea.vmem %s3, %s659
        %p661 = pneg %p111
        %p662 = pneg %p108
        %p663 = pneg %p132
        %p664 = pneg %p129
        %p665 = pneg %p153
        %p666 = pneg %p150
        %p667 = pneg %p174
        %p668 = pneg %p171
        %s669 = smul.u32 4, %s17
        %s670 = smul.u32 4, %s17
        %p671 = scmp.lt.s32.totalorder %s670, 15
        %s672 = scalar_select %p671, %s670, 15
        %s673 = scalar_lea.vmem %s2, %s672
        %s674 = smul.u32 4, %s17
        %s675 = smul.u32 64, %s17
        %p676 = scmp.lt.s32.totalorder %s675, 255
        %s677 = scalar_select %p676, %s675, 255
        %s678 = smul.addr %s677, 4
        %s679 = scalar_lea.vmem %s3, %s678
        %s680 = smul.u32 64, %s17
        %p682 = scmp.eq.s32.totalorder %s17, 0
        // Predicated region
        $region68: #{tsn_forward.1} parent=62 // pred_check
          %p683 = pneg %p682
        $region69: #{tsn_forward.1} parent=62 // pred_check_branch
          %685 = sbr.rel (%p683) target = $region71
        $region70: #{tsn_forward.1} parent=62 // pred_region
          %686 = vst [vmem:[#allocation2] sm:$0xff] 0.0
          %687 = vst [vmem:[#allocation2 + $0x8] sm:$0xff] 0.0
        $region71: #{tsn_forward.1} parent=62 // pred_fallthru
          _
        %v688 = vld [vmem:[%s0] sm:$0xff]
        %v689 = vld [vmem:[%s0 + $0x8] sm:$0xff]
        %v690 = vld [vmem:[%s0 + $0x10] sm:$0xff]
        %v691 = vld [vmem:[%s0 + $0x18] sm:$0xff]
        %v692 = vld [vmem:[%s0 + $0x20] sm:$0xff]
        %v693 = vld [vmem:[%s0 + $0x28] sm:$0xff]
        %v694 = vld [vmem:[%s638] sm:$0xff]
        %v695 = vld [vmem:[%s638 + $0x8] sm:$0xff]
        %v696 = vld [vmem:[%s638 + $0x10] sm:$0xff]
        %v697 = vld [vmem:[%s638 + $0x18] sm:$0xff]
        %v698 = vld [vmem:[%s638 + $0x20] sm:$0xff]
        %v699 = vld [vmem:[%s638 + $0x28] sm:$0xff]
        %v700 = vld [vmem:[%s638 + $0x30] sm:$0xff]
        %v701 = vld [vmem:[%s638 + $0x38] sm:$0xff]
        %v702 = vld [vmem:[%s638 + $0x40] sm:$0xff]
        %v703 = vld [vmem:[%s638 + $0x48] sm:$0xff]
        %v704 = vld [vmem:[%s638 + $0x50] sm:$0xff]
        %v705 = vld [vmem:[%s638 + $0x58] sm:$0xff]
        %v706 = vld [vmem:[%s638 + $0x60] sm:$0xff]
        %v707 = vld [vmem:[%s638 + $0x68] sm:$0xff]
        %v708 = vld [vmem:[%s638 + $0x70] sm:$0xff]
        %v709 = vld [vmem:[%s638 + $0x78] sm:$0xff]
        %v710 = vld [vmem:[%s638 + $0x80] sm:$0xff]
        %v711 = vld [vmem:[%s638 + $0x88] sm:$0xff]
        %v712 = vld [vmem:[%s638 + $0x90] sm:$0xff]
        %v713 = vld [vmem:[%s638 + $0x98] sm:$0xff]
        %v714 = vld [vmem:[%s638 + $0xa0] sm:$0xff]
        %v715 = vld [vmem:[%s638 + $0xa8] sm:$0xff]
        %v716 = vld [vmem:[%s638 + $0xb0] sm:$0xff]
        %v717 = vld [vmem:[%s638 + $0xb8] sm:$0xff]
        %v718 = vld [vmem:[%s638 + $0xc0] sm:$0xff]
        %v719 = vld [vmem:[%s638 + $0xc8] sm:$0xff]
        %v720 = vld [vmem:[%s638 + $0xd0] sm:$0xff]
        %v721 = vld [vmem:[%s638 + $0xd8] sm:$0xff]
        %v722 = vld [vmem:[%s638 + $0xe0] sm:$0xff]
        %v723 = vld [vmem:[%s638 + $0xe8] sm:$0xff]
        %v724 = vld [vmem:[%s638 + $0xf0] sm:$0xff]
        %v725 = vld [vmem:[%s638 + $0xf8] sm:$0xff]
        %v726 = vld [vmem:[%s638 + $0x100] sm:$0xff]
        %v727 = vld [vmem:[%s638 + $0x108] sm:$0xff]
        %v728 = vld [vmem:[%s638 + $0x110] sm:$0xff]
        %v729 = vld [vmem:[%s638 + $0x118] sm:$0xff]
        %v730 = vld [vmem:[%s638 + $0x120] sm:$0xff]
        %v731 = vld [vmem:[%s638 + $0x128] sm:$0xff]
        %v732 = vld [vmem:[%s638 + $0x130] sm:$0xff]
        %v733 = vld [vmem:[%s638 + $0x138] sm:$0xff]
        %v734 = vld [vmem:[%s638 + $0x140] sm:$0xff]
        %v735 = vld [vmem:[%s638 + $0x148] sm:$0xff]
        %v736 = vld [vmem:[%s638 + $0x150] sm:$0xff]
        %v737 = vld [vmem:[%s638 + $0x158] sm:$0xff]
        %v738 = vld [vmem:[%s638 + $0x160] sm:$0xff]
        %v739 = vld [vmem:[%s638 + $0x168] sm:$0xff]
        %v740 = vld [vmem:[%s638 + $0x170] sm:$0xff]
        %v741 = vld [vmem:[%s638 + $0x178] sm:$0xff]
        %v742 = vld [vmem:[%s638 + $0x180] sm:$0xff]
        %v743 = vld [vmem:[%s638 + $0x188] sm:$0xff]
        %v744 = vld [vmem:[%s638 + $0x190] sm:$0xff]
        %v745 = vld [vmem:[%s638 + $0x198] sm:$0xff]
        %v746 = vld [vmem:[%s638 + $0x1a0] sm:$0xff]
        %v747 = vld [vmem:[%s638 + $0x1a8] sm:$0xff]
        %v748 = vld [vmem:[%s638 + $0x1b0] sm:$0xff]
        %v749 = vld [vmem:[%s638 + $0x1b8] sm:$0xff]
        %v750 = vld [vmem:[%s638 + $0x1c0] sm:$0xff]
        %v751 = vld [vmem:[%s638 + $0x1c8] sm:$0xff]
        %v752 = vld [vmem:[%s638 + $0x1d0] sm:$0xff]
        %v753 = vld [vmem:[%s638 + $0x1d8] sm:$0xff]
        %v754 = vld [vmem:[%s638 + $0x1e0] sm:$0xff]
        %v755 = vld [vmem:[%s638 + $0x1e8] sm:$0xff]
        %v756 = vld [vmem:[%s638 + $0x1f0] sm:$0xff]
        %v757 = vld [vmem:[%s638 + $0x1f8] sm:$0xff]
        %v758 = vld [vmem:[%s638 + $0x200] sm:$0xff]
        %v759 = vld [vmem:[%s638 + $0x208] sm:$0xff]
        %v760 = vld [vmem:[%s638 + $0x210] sm:$0xff]
        %v761 = vld [vmem:[%s638 + $0x218] sm:$0xff]
        %v762 = vld [vmem:[%s638 + $0x220] sm:$0xff]
        %v763 = vld [vmem:[%s638 + $0x228] sm:$0xff]
        %v764 = vld [vmem:[%s638 + $0x230] sm:$0xff]
        %v765 = vld [vmem:[%s638 + $0x238] sm:$0xff]
        %v766 = vld [vmem:[%s638 + $0x240] sm:$0xff]
        %v767 = vld [vmem:[%s638 + $0x248] sm:$0xff]
        %v768 = vld [vmem:[%s638 + $0x250] sm:$0xff]
        %v769 = vld [vmem:[%s638 + $0x258] sm:$0xff]
        %v770 = vld [vmem:[%s638 + $0x260] sm:$0xff]
        %v771 = vld [vmem:[%s638 + $0x268] sm:$0xff]
        %v772 = vld [vmem:[%s638 + $0x270] sm:$0xff]
        %v773 = vld [vmem:[%s638 + $0x278] sm:$0xff]
        %v774 = vld [vmem:[%s638 + $0x280] sm:$0xff]
        %v775 = vld [vmem:[%s638 + $0x288] sm:$0xff]
        %v776 = vld [vmem:[%s638 + $0x290] sm:$0xff]
        %v777 = vld [vmem:[%s638 + $0x298] sm:$0xff]
        %v778 = vld [vmem:[%s638 + $0x2a0] sm:$0xff]
        %v779 = vld [vmem:[%s638 + $0x2a8] sm:$0xff]
        %v780 = vld [vmem:[%s638 + $0x2b0] sm:$0xff]
        %v781 = vld [vmem:[%s638 + $0x2b8] sm:$0xff]
        %v782 = vld [vmem:[%s638 + $0x2c0] sm:$0xff]
        %v783 = vld [vmem:[%s638 + $0x2c8] sm:$0xff]
        %v784 = vld [vmem:[%s638 + $0x2d0] sm:$0xff]
        %v785 = vld [vmem:[%s638 + $0x2d8] sm:$0xff]
        %v786 = vld [vmem:[%s638 + $0x2e0] sm:$0xff]
        %v787 = vld [vmem:[%s638 + $0x2e8] sm:$0xff]
        %v788 = vld [vmem:[%s638 + $0x2f0] sm:$0xff]
        %v789 = vld [vmem:[%s638 + $0x2f8] sm:$0xff]
        %v790 = vld [vmem:[%s638 + $0x300] sm:$0xff]
        %v791 = vld [vmem:[%s638 + $0x308] sm:$0xff]
        %v792 = vld [vmem:[%s638 + $0x310] sm:$0xff]
        %v793 = vld [vmem:[%s638 + $0x318] sm:$0xff]
        %v794 = vld [vmem:[%s638 + $0x320] sm:$0xff]
        %v795 = vld [vmem:[%s638 + $0x328] sm:$0xff]
        %v796 = vld [vmem:[%s638 + $0x330] sm:$0xff]
        %v797 = vld [vmem:[%s638 + $0x338] sm:$0xff]
        %v798 = vld [vmem:[%s638 + $0x340] sm:$0xff]
        %v799 = vld [vmem:[%s638 + $0x348] sm:$0xff]
        %v800 = vld [vmem:[%s638 + $0x350] sm:$0xff]
        %v801 = vld [vmem:[%s638 + $0x358] sm:$0xff]
        %v802 = vld [vmem:[%s638 + $0x360] sm:$0xff]
        %v803 = vld [vmem:[%s638 + $0x368] sm:$0xff]
        %v804 = vld [vmem:[%s638 + $0x370] sm:$0xff]
        %v805 = vld [vmem:[%s638 + $0x378] sm:$0xff]
        %v806 = vld [vmem:[%s638 + $0x380] sm:$0xff]
        %v807 = vld [vmem:[%s638 + $0x388] sm:$0xff]
        %v808 = vld [vmem:[%s638 + $0x390] sm:$0xff]
        %v809 = vld [vmem:[%s638 + $0x398] sm:$0xff]
        %v810 = vld [vmem:[%s638 + $0x3a0] sm:$0xff]
        %v811 = vld [vmem:[%s638 + $0x3a8] sm:$0xff]
        %v812 = vld [vmem:[%s638 + $0x3b0] sm:$0xff]
        %v813 = vld [vmem:[%s638 + $0x3b8] sm:$0xff]
        %v814 = vld [vmem:[%s638 + $0x3c0] sm:$0xff]
        %v815 = vld [vmem:[%s638 + $0x3c8] sm:$0xff]
        %v816 = vld [vmem:[%s638 + $0x3d0] sm:$0xff]
        %v817 = vld [vmem:[%s638 + $0x3d8] sm:$0xff]
        %v818 = vld [vmem:[%s638 + $0x3e0] sm:$0xff]
        %v819 = vld [vmem:[%s638 + $0x3e8] sm:$0xff]
        %v820 = vld [vmem:[%s638 + $0x3f0] sm:$0xff]
        %v821 = vld [vmem:[%s638 + $0x3f8] sm:$0xff]
        %v822 = vld [vmem:[%s638 + $0x400] sm:$0xff]
        %v823 = vld [vmem:[%s638 + $0x408] sm:$0xff]
        %v824 = vld [vmem:[%s638 + $0x410] sm:$0xff]
        %v825 = vld [vmem:[%s638 + $0x418] sm:$0xff]
        %v826 = vld [vmem:[%s638 + $0x420] sm:$0xff]
        %v827 = vld [vmem:[%s638 + $0x428] sm:$0xff]
        %v828 = vld [vmem:[%s638 + $0x430] sm:$0xff]
        %v829 = vld [vmem:[%s638 + $0x438] sm:$0xff]
        %v830 = vld [vmem:[%s638 + $0x440] sm:$0xff]
        %v831 = vld [vmem:[%s638 + $0x448] sm:$0xff]
        %v832 = vld [vmem:[%s638 + $0x450] sm:$0xff]
        %v833 = vld [vmem:[%s638 + $0x458] sm:$0xff]
        %v834 = vld [vmem:[%s638 + $0x460] sm:$0xff]
        %v835 = vld [vmem:[%s638 + $0x468] sm:$0xff]
        %v836 = vld [vmem:[%s638 + $0x470] sm:$0xff]
        %v837 = vld [vmem:[%s638 + $0x478] sm:$0xff]
        %v838 = vld [vmem:[%s638 + $0x480] sm:$0xff]
        %v839 = vld [vmem:[%s638 + $0x488] sm:$0xff]
        %v840 = vld [vmem:[%s638 + $0x490] sm:$0xff]
        %v841 = vld [vmem:[%s638 + $0x498] sm:$0xff]
        %v842 = vld [vmem:[%s638 + $0x4a0] sm:$0xff]
        %v843 = vld [vmem:[%s638 + $0x4a8] sm:$0xff]
        %v844 = vld [vmem:[%s638 + $0x4b0] sm:$0xff]
        %v845 = vld [vmem:[%s638 + $0x4b8] sm:$0xff]
        %v846 = vld [vmem:[%s638 + $0x4c0] sm:$0xff]
        %v847 = vld [vmem:[%s638 + $0x4c8] sm:$0xff]
        %v848 = vld [vmem:[%s638 + $0x4d0] sm:$0xff]
        %v849 = vld [vmem:[%s638 + $0x4d8] sm:$0xff]
        %v850 = vld [vmem:[%s638 + $0x4e0] sm:$0xff]
        %v851 = vld [vmem:[%s638 + $0x4e8] sm:$0xff]
        %v852 = vld [vmem:[%s638 + $0x4f0] sm:$0xff]
        %v853 = vld [vmem:[%s638 + $0x4f8] sm:$0xff]
        %v854 = vld [vmem:[%s638 + $0x500] sm:$0xff]
        %v855 = vld [vmem:[%s638 + $0x508] sm:$0xff]
        %v856 = vld [vmem:[%s638 + $0x510] sm:$0xff]
        %v857 = vld [vmem:[%s638 + $0x518] sm:$0xff]
        %v858 = vld [vmem:[%s638 + $0x520] sm:$0xff]
        %v859 = vld [vmem:[%s638 + $0x528] sm:$0xff]
        %v860 = vld [vmem:[%s638 + $0x530] sm:$0xff]
        %v861 = vld [vmem:[%s638 + $0x538] sm:$0xff]
        %v862 = vld [vmem:[%s638 + $0x540] sm:$0xff]
        %v863 = vld [vmem:[%s638 + $0x548] sm:$0xff]
        %v864 = vld [vmem:[%s638 + $0x550] sm:$0xff]
        %v865 = vld [vmem:[%s638 + $0x558] sm:$0xff]
        %v866 = vld [vmem:[%s638 + $0x560] sm:$0xff]
        %v867 = vld [vmem:[%s638 + $0x568] sm:$0xff]
        %v868 = vld [vmem:[%s638 + $0x570] sm:$0xff]
        %v869 = vld [vmem:[%s638 + $0x578] sm:$0xff]
        %v870 = vld [vmem:[%s638 + $0x580] sm:$0xff]
        %v871 = vld [vmem:[%s638 + $0x588] sm:$0xff]
        %v872 = vld [vmem:[%s638 + $0x590] sm:$0xff]
        %v873 = vld [vmem:[%s638 + $0x598] sm:$0xff]
        %v874 = vld [vmem:[%s638 + $0x5a0] sm:$0xff]
        %v875 = vld [vmem:[%s638 + $0x5a8] sm:$0xff]
        %v876 = vld [vmem:[%s638 + $0x5b0] sm:$0xff]
        %v877 = vld [vmem:[%s638 + $0x5b8] sm:$0xff]
        %v878 = vld [vmem:[%s638 + $0x5c0] sm:$0xff]
        %v879 = vld [vmem:[%s638 + $0x5c8] sm:$0xff]
        %v880 = vld [vmem:[%s638 + $0x5d0] sm:$0xff]
        %v881 = vld [vmem:[%s638 + $0x5d8] sm:$0xff]
        %v882 = vld [vmem:[%s638 + $0x5e0] sm:$0xff]
        %v883 = vld [vmem:[%s638 + $0x5e8] sm:$0xff]
        %v884 = vld [vmem:[%s638 + $0x5f0] sm:$0xff]
        %v885 = vld [vmem:[%s638 + $0x5f8] sm:$0xff]
        %v886 = vld [vmem:[%s673] sm:$0xf]
        %v888 = vlaneseq
        %v889 = vshrl.u32 %v888, 7
        %v890 = vsub.s32 0, %v889
        %v891 = vrot.slane %v886, %v890
        %v892 = vlaneseq
        %v893 = vshrl.u32 %v892, 7
        %v894 = vsub.s32 1, %v893
        %v895 = vrot.slane %v886, %v894
        %v896 = vlaneseq
        %v897 = vshrl.u32 %v896, 7
        %v898 = vsub.s32 2, %v897
        %v899 = vrot.slane %v886, %v898
        %v900 = vlaneseq
        %v901 = vshrl.u32 %v900, 7
        %v902 = vsub.s32 3, %v901
        %v903 = vrot.slane %v886, %v902
        %v914 = vunpack.c.l.b16 %v688
        %v915 = vunpack.c.h.b16 %v688
        %v916 = vunpack.c.l.b16 %v689
        %v917 = vunpack.c.h.b16 %v689
        %v918 = vunpack.c.l.b16 %v690
        %v919 = vunpack.c.h.b16 %v690
        %v920 = vunpack.c.l.b16 %v691
        %v921 = vunpack.c.h.b16 %v691
        %v922 = vunpack.c.l.b16 %v692
        %v923 = vunpack.c.h.b16 %v692
        %v924 = vunpack.c.l.b16 %v693
        %v925 = vunpack.c.h.b16 %v693
        %v926 = vpack.c.b16 %v920, %v914
        %v927 = vpack.c.b16 %v921, %v915
        %v928 = vpack.c.b16 %v922, %v916
        %v929 = vpack.c.b16 %v923, %v917
        %v930 = vpack.c.b16 %v924, %v918
        %v931 = vpack.c.b16 %v925, %v919
        %v1130 = vunpack.c.l.b16 %v694
        %v1131 = vunpack.c.h.b16 %v694
        %v1132 = vunpack.c.l.b16 %v695
        %v1133 = vunpack.c.h.b16 %v695
        %v1134 = vunpack.c.l.b16 %v696
        %v1135 = vunpack.c.h.b16 %v696
        %v1136 = vunpack.c.l.b16 %v697
        %v1137 = vunpack.c.h.b16 %v697
        %v1138 = vunpack.c.l.b16 %v698
        %v1139 = vunpack.c.h.b16 %v698
        %v1140 = vunpack.c.l.b16 %v699
        %v1141 = vunpack.c.h.b16 %v699
        %v1142 = vunpack.c.l.b16 %v700
        %v1143 = vunpack.c.h.b16 %v700
        %v1144 = vunpack.c.l.b16 %v701
        %v1145 = vunpack.c.h.b16 %v701
        %v1146 = vunpack.c.l.b16 %v702
        %v1147 = vunpack.c.h.b16 %v702
        %v1148 = vunpack.c.l.b16 %v703
        %v1149 = vunpack.c.h.b16 %v703
        %v1150 = vunpack.c.l.b16 %v704
        %v1151 = vunpack.c.h.b16 %v704
        %v1152 = vunpack.c.l.b16 %v705
        %v1153 = vunpack.c.h.b16 %v705
        %v1154 = vunpack.c.l.b16 %v706
        %v1155 = vunpack.c.h.b16 %v706
        %v1156 = vunpack.c.l.b16 %v707
        %v1157 = vunpack.c.h.b16 %v707
        %v1158 = vunpack.c.l.b16 %v708
        %v1159 = vunpack.c.h.b16 %v708
        %v1160 = vunpack.c.l.b16 %v709
        %v1161 = vunpack.c.h.b16 %v709
        %v1162 = vunpack.c.l.b16 %v710
        %v1163 = vunpack.c.h.b16 %v710
        %v1164 = vunpack.c.l.b16 %v711
        %v1165 = vunpack.c.h.b16 %v711
        %v1166 = vunpack.c.l.b16 %v712
        %v1167 = vunpack.c.h.b16 %v712
        %v1168 = vunpack.c.l.b16 %v713
        %v1169 = vunpack.c.h.b16 %v713
        %v1170 = vunpack.c.l.b16 %v714
        %v1171 = vunpack.c.h.b16 %v714
        %v1172 = vunpack.c.l.b16 %v715
        %v1173 = vunpack.c.h.b16 %v715
        %v1174 = vunpack.c.l.b16 %v716
        %v1175 = vunpack.c.h.b16 %v716
        %v1176 = vunpack.c.l.b16 %v717
        %v1177 = vunpack.c.h.b16 %v717
        %v1178 = vunpack.c.l.b16 %v718
        %v1179 = vunpack.c.h.b16 %v718
        %v1180 = vunpack.c.l.b16 %v719
        %v1181 = vunpack.c.h.b16 %v719
        %v1182 = vunpack.c.l.b16 %v720
        %v1183 = vunpack.c.h.b16 %v720
        %v1184 = vunpack.c.l.b16 %v721
        %v1185 = vunpack.c.h.b16 %v721
        %v1186 = vunpack.c.l.b16 %v722
        %v1187 = vunpack.c.h.b16 %v722
        %v1188 = vunpack.c.l.b16 %v723
        %v1189 = vunpack.c.h.b16 %v723
        %v1190 = vunpack.c.l.b16 %v724
        %v1191 = vunpack.c.h.b16 %v724
        %v1192 = vunpack.c.l.b16 %v725
        %v1193 = vunpack.c.h.b16 %v725
        %v1194 = vunpack.c.l.b16 %v726
        %v1195 = vunpack.c.h.b16 %v726
        %v1196 = vunpack.c.l.b16 %v727
        %v1197 = vunpack.c.h.b16 %v727
        %v1198 = vunpack.c.l.b16 %v728
        %v1199 = vunpack.c.h.b16 %v728
        %v1200 = vunpack.c.l.b16 %v729
        %v1201 = vunpack.c.h.b16 %v729
        %v1202 = vunpack.c.l.b16 %v730
        %v1203 = vunpack.c.h.b16 %v730
        %v1204 = vunpack.c.l.b16 %v731
        %v1205 = vunpack.c.h.b16 %v731
        %v1206 = vunpack.c.l.b16 %v732
        %v1207 = vunpack.c.h.b16 %v732
        %v1208 = vunpack.c.l.b16 %v733
        %v1209 = vunpack.c.h.b16 %v733
        %v1210 = vunpack.c.l.b16 %v734
        %v1211 = vunpack.c.h.b16 %v734
        %v1212 = vunpack.c.l.b16 %v735
        %v1213 = vunpack.c.h.b16 %v735
        %v1214 = vunpack.c.l.b16 %v736
        %v1215 = vunpack.c.h.b16 %v736
        %v1216 = vunpack.c.l.b16 %v737
        %v1217 = vunpack.c.h.b16 %v737
        %v1218 = vunpack.c.l.b16 %v738
        %v1219 = vunpack.c.h.b16 %v738
        %v1220 = vunpack.c.l.b16 %v739
        %v1221 = vunpack.c.h.b16 %v739
        %v1222 = vunpack.c.l.b16 %v740
        %v1223 = vunpack.c.h.b16 %v740
        %v1224 = vunpack.c.l.b16 %v741
        %v1225 = vunpack.c.h.b16 %v741
        %v1226 = vunpack.c.l.b16 %v742
        %v1227 = vunpack.c.h.b16 %v742
        %v1228 = vunpack.c.l.b16 %v743
        %v1229 = vunpack.c.h.b16 %v743
        %v1230 = vunpack.c.l.b16 %v744
        %v1231 = vunpack.c.h.b16 %v744
        %v1232 = vunpack.c.l.b16 %v745
        %v1233 = vunpack.c.h.b16 %v745
        %v1234 = vunpack.c.l.b16 %v746
        %v1235 = vunpack.c.h.b16 %v746
        %v1236 = vunpack.c.l.b16 %v747
        %v1237 = vunpack.c.h.b16 %v747
        %v1238 = vunpack.c.l.b16 %v748
        %v1239 = vunpack.c.h.b16 %v748
        %v1240 = vunpack.c.l.b16 %v749
        %v1241 = vunpack.c.h.b16 %v749
        %v1242 = vunpack.c.l.b16 %v750
        %v1243 = vunpack.c.h.b16 %v750
        %v1244 = vunpack.c.l.b16 %v751
        %v1245 = vunpack.c.h.b16 %v751
        %v1246 = vunpack.c.l.b16 %v752
        %v1247 = vunpack.c.h.b16 %v752
        %v1248 = vunpack.c.l.b16 %v753
        %v1249 = vunpack.c.h.b16 %v753
        %v1250 = vunpack.c.l.b16 %v754
        %v1251 = vunpack.c.h.b16 %v754
        %v1252 = vunpack.c.l.b16 %v755
        %v1253 = vunpack.c.h.b16 %v755
        %v1254 = vunpack.c.l.b16 %v756
        %v1255 = vunpack.c.h.b16 %v756
        %v1256 = vunpack.c.l.b16 %v757
        %v1257 = vunpack.c.h.b16 %v757
        %v1258 = vunpack.c.l.b16 %v758
        %v1259 = vunpack.c.h.b16 %v758
        %v1260 = vunpack.c.l.b16 %v759
        %v1261 = vunpack.c.h.b16 %v759
        %v1262 = vunpack.c.l.b16 %v760
        %v1263 = vunpack.c.h.b16 %v760
        %v1264 = vunpack.c.l.b16 %v761
        %v1265 = vunpack.c.h.b16 %v761
        %v1266 = vunpack.c.l.b16 %v762
        %v1267 = vunpack.c.h.b16 %v762
        %v1268 = vunpack.c.l.b16 %v763
        %v1269 = vunpack.c.h.b16 %v763
        %v1270 = vunpack.c.l.b16 %v764
        %v1271 = vunpack.c.h.b16 %v764
        %v1272 = vunpack.c.l.b16 %v765
        %v1273 = vunpack.c.h.b16 %v765
        %v1274 = vunpack.c.l.b16 %v766
        %v1275 = vunpack.c.h.b16 %v766
        %v1276 = vunpack.c.l.b16 %v767
        %v1277 = vunpack.c.h.b16 %v767
        %v1278 = vunpack.c.l.b16 %v768
        %v1279 = vunpack.c.h.b16 %v768
        %v1280 = vunpack.c.l.b16 %v769
        %v1281 = vunpack.c.h.b16 %v769
        %v1282 = vunpack.c.l.b16 %v770
        %v1283 = vunpack.c.h.b16 %v770
        %v1284 = vunpack.c.l.b16 %v771
        %v1285 = vunpack.c.h.b16 %v771
        %v1286 = vunpack.c.l.b16 %v772
        %v1287 = vunpack.c.h.b16 %v772
        %v1288 = vunpack.c.l.b16 %v773
        %v1289 = vunpack.c.h.b16 %v773
        %v1290 = vunpack.c.l.b16 %v774
        %v1291 = vunpack.c.h.b16 %v774
        %v1292 = vunpack.c.l.b16 %v775
        %v1293 = vunpack.c.h.b16 %v775
        %v1294 = vunpack.c.l.b16 %v776
        %v1295 = vunpack.c.h.b16 %v776
        %v1296 = vunpack.c.l.b16 %v777
        %v1297 = vunpack.c.h.b16 %v777
        %v1298 = vunpack.c.l.b16 %v778
        %v1299 = vunpack.c.h.b16 %v778
        %v1300 = vunpack.c.l.b16 %v779
        %v1301 = vunpack.c.h.b16 %v779
        %v1302 = vunpack.c.l.b16 %v780
        %v1303 = vunpack.c.h.b16 %v780
        %v1304 = vunpack.c.l.b16 %v781
        %v1305 = vunpack.c.h.b16 %v781
        %v1306 = vunpack.c.l.b16 %v782
        %v1307 = vunpack.c.h.b16 %v782
        %v1308 = vunpack.c.l.b16 %v783
        %v1309 = vunpack.c.h.b16 %v783
        %v1310 = vunpack.c.l.b16 %v784
        %v1311 = vunpack.c.h.b16 %v784
        %v1312 = vunpack.c.l.b16 %v785
        %v1313 = vunpack.c.h.b16 %v785
        %v1314 = vunpack.c.l.b16 %v786
        %v1315 = vunpack.c.h.b16 %v786
        %v1316 = vunpack.c.l.b16 %v787
        %v1317 = vunpack.c.h.b16 %v787
        %v1318 = vunpack.c.l.b16 %v788
        %v1319 = vunpack.c.h.b16 %v788
        %v1320 = vunpack.c.l.b16 %v789
        %v1321 = vunpack.c.h.b16 %v789
        %v1322 = vunpack.c.l.b16 %v790
        %v1323 = vunpack.c.h.b16 %v790
        %v1324 = vunpack.c.l.b16 %v791
        %v1325 = vunpack.c.h.b16 %v791
        %v1326 = vunpack.c.l.b16 %v792
        %v1327 = vunpack.c.h.b16 %v792
        %v1328 = vunpack.c.l.b16 %v793
        %v1329 = vunpack.c.h.b16 %v793
        %v1330 = vunpack.c.l.b16 %v794
        %v1331 = vunpack.c.h.b16 %v794
        %v1332 = vunpack.c.l.b16 %v795
        %v1333 = vunpack.c.h.b16 %v795
        %v1334 = vunpack.c.l.b16 %v796
        %v1335 = vunpack.c.h.b16 %v796
        %v1336 = vunpack.c.l.b16 %v797
        %v1337 = vunpack.c.h.b16 %v797
        %v1338 = vunpack.c.l.b16 %v798
        %v1339 = vunpack.c.h.b16 %v798
        %v1340 = vunpack.c.l.b16 %v799
        %v1341 = vunpack.c.h.b16 %v799
        %v1342 = vunpack.c.l.b16 %v800
        %v1343 = vunpack.c.h.b16 %v800
        %v1344 = vunpack.c.l.b16 %v801
        %v1345 = vunpack.c.h.b16 %v801
        %v1346 = vunpack.c.l.b16 %v802
        %v1347 = vunpack.c.h.b16 %v802
        %v1348 = vunpack.c.l.b16 %v803
        %v1349 = vunpack.c.h.b16 %v803
        %v1350 = vunpack.c.l.b16 %v804
        %v1351 = vunpack.c.h.b16 %v804
        %v1352 = vunpack.c.l.b16 %v805
        %v1353 = vunpack.c.h.b16 %v805
        %v1354 = vunpack.c.l.b16 %v806
        %v1355 = vunpack.c.h.b16 %v806
        %v1356 = vunpack.c.l.b16 %v807
        %v1357 = vunpack.c.h.b16 %v807
        %v1358 = vunpack.c.l.b16 %v808
        %v1359 = vunpack.c.h.b16 %v808
        %v1360 = vunpack.c.l.b16 %v809
        %v1361 = vunpack.c.h.b16 %v809
        %v1362 = vunpack.c.l.b16 %v810
        %v1363 = vunpack.c.h.b16 %v810
        %v1364 = vunpack.c.l.b16 %v811
        %v1365 = vunpack.c.h.b16 %v811
        %v1366 = vunpack.c.l.b16 %v812
        %v1367 = vunpack.c.h.b16 %v812
        %v1368 = vunpack.c.l.b16 %v813
        %v1369 = vunpack.c.h.b16 %v813
        %v1370 = vunpack.c.l.b16 %v814
        %v1371 = vunpack.c.h.b16 %v814
        %v1372 = vunpack.c.l.b16 %v815
        %v1373 = vunpack.c.h.b16 %v815
        %v1374 = vunpack.c.l.b16 %v816
        %v1375 = vunpack.c.h.b16 %v816
        %v1376 = vunpack.c.l.b16 %v817
        %v1377 = vunpack.c.h.b16 %v817
        %v1378 = vunpack.c.l.b16 %v818
        %v1379 = vunpack.c.h.b16 %v818
        %v1380 = vunpack.c.l.b16 %v819
        %v1381 = vunpack.c.h.b16 %v819
        %v1382 = vunpack.c.l.b16 %v820
        %v1383 = vunpack.c.h.b16 %v820
        %v1384 = vunpack.c.l.b16 %v821
        %v1385 = vunpack.c.h.b16 %v821
        %v1386 = vunpack.c.l.b16 %v822
        %v1387 = vunpack.c.h.b16 %v822
        %v1388 = vunpack.c.l.b16 %v823
        %v1389 = vunpack.c.h.b16 %v823
        %v1390 = vunpack.c.l.b16 %v824
        %v1391 = vunpack.c.h.b16 %v824
        %v1392 = vunpack.c.l.b16 %v825
        %v1393 = vunpack.c.h.b16 %v825
        %v1394 = vunpack.c.l.b16 %v826
        %v1395 = vunpack.c.h.b16 %v826
        %v1396 = vunpack.c.l.b16 %v827
        %v1397 = vunpack.c.h.b16 %v827
        %v1398 = vunpack.c.l.b16 %v828
        %v1399 = vunpack.c.h.b16 %v828
        %v1400 = vunpack.c.l.b16 %v829
        %v1401 = vunpack.c.h.b16 %v829
        %v1402 = vunpack.c.l.b16 %v830
        %v1403 = vunpack.c.h.b16 %v830
        %v1404 = vunpack.c.l.b16 %v831
        %v1405 = vunpack.c.h.b16 %v831
        %v1406 = vunpack.c.l.b16 %v832
        %v1407 = vunpack.c.h.b16 %v832
        %v1408 = vunpack.c.l.b16 %v833
        %v1409 = vunpack.c.h.b16 %v833
        %v1410 = vunpack.c.l.b16 %v834
        %v1411 = vunpack.c.h.b16 %v834
        %v1412 = vunpack.c.l.b16 %v835
        %v1413 = vunpack.c.h.b16 %v835
        %v1414 = vunpack.c.l.b16 %v836
        %v1415 = vunpack.c.h.b16 %v836
        %v1416 = vunpack.c.l.b16 %v837
        %v1417 = vunpack.c.h.b16 %v837
        %v1418 = vunpack.c.l.b16 %v838
        %v1419 = vunpack.c.h.b16 %v838
        %v1420 = vunpack.c.l.b16 %v839
        %v1421 = vunpack.c.h.b16 %v839
        %v1422 = vunpack.c.l.b16 %v840
        %v1423 = vunpack.c.h.b16 %v840
        %v1424 = vunpack.c.l.b16 %v841
        %v1425 = vunpack.c.h.b16 %v841
        %v1426 = vunpack.c.l.b16 %v842
        %v1427 = vunpack.c.h.b16 %v842
        %v1428 = vunpack.c.l.b16 %v843
        %v1429 = vunpack.c.h.b16 %v843
        %v1430 = vunpack.c.l.b16 %v844
        %v1431 = vunpack.c.h.b16 %v844
        %v1432 = vunpack.c.l.b16 %v845
        %v1433 = vunpack.c.h.b16 %v845
        %v1434 = vunpack.c.l.b16 %v846
        %v1435 = vunpack.c.h.b16 %v846
        %v1436 = vunpack.c.l.b16 %v847
        %v1437 = vunpack.c.h.b16 %v847
        %v1438 = vunpack.c.l.b16 %v848
        %v1439 = vunpack.c.h.b16 %v848
        %v1440 = vunpack.c.l.b16 %v849
        %v1441 = vunpack.c.h.b16 %v849
        %v1442 = vunpack.c.l.b16 %v850
        %v1443 = vunpack.c.h.b16 %v850
        %v1444 = vunpack.c.l.b16 %v851
        %v1445 = vunpack.c.h.b16 %v851
        %v1446 = vunpack.c.l.b16 %v852
        %v1447 = vunpack.c.h.b16 %v852
        %v1448 = vunpack.c.l.b16 %v853
        %v1449 = vunpack.c.h.b16 %v853
        %v1450 = vunpack.c.l.b16 %v854
        %v1451 = vunpack.c.h.b16 %v854
        %v1452 = vunpack.c.l.b16 %v855
        %v1453 = vunpack.c.h.b16 %v855
        %v1454 = vunpack.c.l.b16 %v856
        %v1455 = vunpack.c.h.b16 %v856
        %v1456 = vunpack.c.l.b16 %v857
        %v1457 = vunpack.c.h.b16 %v857
        %v1458 = vunpack.c.l.b16 %v858
        %v1459 = vunpack.c.h.b16 %v858
        %v1460 = vunpack.c.l.b16 %v859
        %v1461 = vunpack.c.h.b16 %v859
        %v1462 = vunpack.c.l.b16 %v860
        %v1463 = vunpack.c.h.b16 %v860
        %v1464 = vunpack.c.l.b16 %v861
        %v1465 = vunpack.c.h.b16 %v861
        %v1466 = vunpack.c.l.b16 %v862
        %v1467 = vunpack.c.h.b16 %v862
        %v1468 = vunpack.c.l.b16 %v863
        %v1469 = vunpack.c.h.b16 %v863
        %v1470 = vunpack.c.l.b16 %v864
        %v1471 = vunpack.c.h.b16 %v864
        %v1472 = vunpack.c.l.b16 %v865
        %v1473 = vunpack.c.h.b16 %v865
        %v1474 = vunpack.c.l.b16 %v866
        %v1475 = vunpack.c.h.b16 %v866
        %v1476 = vunpack.c.l.b16 %v867
        %v1477 = vunpack.c.h.b16 %v867
        %v1478 = vunpack.c.l.b16 %v868
        %v1479 = vunpack.c.h.b16 %v868
        %v1480 = vunpack.c.l.b16 %v869
        %v1481 = vunpack.c.h.b16 %v869
        %v1482 = vunpack.c.l.b16 %v870
        %v1483 = vunpack.c.h.b16 %v870
        %v1484 = vunpack.c.l.b16 %v871
        %v1485 = vunpack.c.h.b16 %v871
        %v1486 = vunpack.c.l.b16 %v872
        %v1487 = vunpack.c.h.b16 %v872
        %v1488 = vunpack.c.l.b16 %v873
        %v1489 = vunpack.c.h.b16 %v873
        %v1490 = vunpack.c.l.b16 %v874
        %v1491 = vunpack.c.h.b16 %v874
        %v1492 = vunpack.c.l.b16 %v875
        %v1493 = vunpack.c.h.b16 %v875
        %v1494 = vunpack.c.l.b16 %v876
        %v1495 = vunpack.c.h.b16 %v876
        %v1496 = vunpack.c.l.b16 %v877
        %v1497 = vunpack.c.h.b16 %v877
        %v1498 = vunpack.c.l.b16 %v878
        %v1499 = vunpack.c.h.b16 %v878
        %v1500 = vunpack.c.l.b16 %v879
        %v1501 = vunpack.c.h.b16 %v879
        %v1502 = vunpack.c.l.b16 %v880
        %v1503 = vunpack.c.h.b16 %v880
        %v1504 = vunpack.c.l.b16 %v881
        %v1505 = vunpack.c.h.b16 %v881
        %v1506 = vunpack.c.l.b16 %v882
        %v1507 = vunpack.c.h.b16 %v882
        %v1508 = vunpack.c.l.b16 %v883
        %v1509 = vunpack.c.h.b16 %v883
        %v1510 = vunpack.c.l.b16 %v884
        %v1511 = vunpack.c.h.b16 %v884
        %v1512 = vunpack.c.l.b16 %v885
        %v1513 = vunpack.c.h.b16 %v885
        %v1514 = vpack.c.b16 %v1134, %v1130
        %v1515 = vpack.c.b16 %v1135, %v1131
        %v1516 = vpack.c.b16 %v1136, %v1132
        %v1517 = vpack.c.b16 %v1137, %v1133
        %v1518 = vpack.c.b16 %v1142, %v1138
        %v1519 = vpack.c.b16 %v1143, %v1139
        %v1520 = vpack.c.b16 %v1144, %v1140
        %v1521 = vpack.c.b16 %v1145, %v1141
        %v1522 = vpack.c.b16 %v1150, %v1146
        %v1523 = vpack.c.b16 %v1151, %v1147
        %v1524 = vpack.c.b16 %v1152, %v1148
        %v1525 = vpack.c.b16 %v1153, %v1149
        %v1526 = vpack.c.b16 %v1158, %v1154
        %v1527 = vpack.c.b16 %v1159, %v1155
        %v1528 = vpack.c.b16 %v1160, %v1156
        %v1529 = vpack.c.b16 %v1161, %v1157
        %v1530 = vpack.c.b16 %v1166, %v1162
        %v1531 = vpack.c.b16 %v1167, %v1163
        %v1532 = vpack.c.b16 %v1168, %v1164
        %v1533 = vpack.c.b16 %v1169, %v1165
        %v1534 = vpack.c.b16 %v1174, %v1170
        %v1535 = vpack.c.b16 %v1175, %v1171
        %v1536 = vpack.c.b16 %v1176, %v1172
        %v1537 = vpack.c.b16 %v1177, %v1173
        %v1538 = vpack.c.b16 %v1182, %v1178
        %v1539 = vpack.c.b16 %v1183, %v1179
        %v1540 = vpack.c.b16 %v1184, %v1180
        %v1541 = vpack.c.b16 %v1185, %v1181
        %v1542 = vpack.c.b16 %v1190, %v1186
        %v1543 = vpack.c.b16 %v1191, %v1187
        %v1544 = vpack.c.b16 %v1192, %v1188
        %v1545 = vpack.c.b16 %v1193, %v1189
        %v1546 = vpack.c.b16 %v1198, %v1194
        %v1547 = vpack.c.b16 %v1199, %v1195
        %v1548 = vpack.c.b16 %v1200, %v1196
        %v1549 = vpack.c.b16 %v1201, %v1197
        %v1550 = vpack.c.b16 %v1206, %v1202
        %v1551 = vpack.c.b16 %v1207, %v1203
        %v1552 = vpack.c.b16 %v1208, %v1204
        %v1553 = vpack.c.b16 %v1209, %v1205
        %v1554 = vpack.c.b16 %v1214, %v1210
        %v1555 = vpack.c.b16 %v1215, %v1211
        %v1556 = vpack.c.b16 %v1216, %v1212
        %v1557 = vpack.c.b16 %v1217, %v1213
        %v1558 = vpack.c.b16 %v1222, %v1218
        %v1559 = vpack.c.b16 %v1223, %v1219
        %v1560 = vpack.c.b16 %v1224, %v1220
        %v1561 = vpack.c.b16 %v1225, %v1221
        %v1562 = vpack.c.b16 %v1230, %v1226
        %v1563 = vpack.c.b16 %v1231, %v1227
        %v1564 = vpack.c.b16 %v1232, %v1228
        %v1565 = vpack.c.b16 %v1233, %v1229
        %v1566 = vpack.c.b16 %v1238, %v1234
        %v1567 = vpack.c.b16 %v1239, %v1235
        %v1568 = vpack.c.b16 %v1240, %v1236
        %v1569 = vpack.c.b16 %v1241, %v1237
        %v1570 = vpack.c.b16 %v1246, %v1242
        %v1571 = vpack.c.b16 %v1247, %v1243
        %v1572 = vpack.c.b16 %v1248, %v1244
        %v1573 = vpack.c.b16 %v1249, %v1245
        %v1574 = vpack.c.b16 %v1254, %v1250
        %v1575 = vpack.c.b16 %v1255, %v1251
        %v1576 = vpack.c.b16 %v1256, %v1252
        %v1577 = vpack.c.b16 %v1257, %v1253
        %v1578 = vpack.c.b16 %v1262, %v1258
        %v1579 = vpack.c.b16 %v1263, %v1259
        %v1580 = vpack.c.b16 %v1264, %v1260
        %v1581 = vpack.c.b16 %v1265, %v1261
        %v1582 = vpack.c.b16 %v1270, %v1266
        %v1583 = vpack.c.b16 %v1271, %v1267
        %v1584 = vpack.c.b16 %v1272, %v1268
        %v1585 = vpack.c.b16 %v1273, %v1269
        %v1586 = vpack.c.b16 %v1278, %v1274
        %v1587 = vpack.c.b16 %v1279, %v1275
        %v1588 = vpack.c.b16 %v1280, %v1276
        %v1589 = vpack.c.b16 %v1281, %v1277
        %v1590 = vpack.c.b16 %v1286, %v1282
        %v1591 = vpack.c.b16 %v1287, %v1283
        %v1592 = vpack.c.b16 %v1288, %v1284
        %v1593 = vpack.c.b16 %v1289, %v1285
        %v1594 = vpack.c.b16 %v1294, %v1290
        %v1595 = vpack.c.b16 %v1295, %v1291
        %v1596 = vpack.c.b16 %v1296, %v1292
        %v1597 = vpack.c.b16 %v1297, %v1293
        %v1598 = vpack.c.b16 %v1302, %v1298
        %v1599 = vpack.c.b16 %v1303, %v1299
        %v1600 = vpack.c.b16 %v1304, %v1300
        %v1601 = vpack.c.b16 %v1305, %v1301
        %v1602 = vpack.c.b16 %v1310, %v1306
        %v1603 = vpack.c.b16 %v1311, %v1307
        %v1604 = vpack.c.b16 %v1312, %v1308
        %v1605 = vpack.c.b16 %v1313, %v1309
        %v1606 = vpack.c.b16 %v1318, %v1314
        %v1607 = vpack.c.b16 %v1319, %v1315
        %v1608 = vpack.c.b16 %v1320, %v1316
        %v1609 = vpack.c.b16 %v1321, %v1317
        %v1610 = vpack.c.b16 %v1326, %v1322
        %v1611 = vpack.c.b16 %v1327, %v1323
        %v1612 = vpack.c.b16 %v1328, %v1324
        %v1613 = vpack.c.b16 %v1329, %v1325
        %v1614 = vpack.c.b16 %v1334, %v1330
        %v1615 = vpack.c.b16 %v1335, %v1331
        %v1616 = vpack.c.b16 %v1336, %v1332
        %v1617 = vpack.c.b16 %v1337, %v1333
        %v1618 = vpack.c.b16 %v1342, %v1338
        %v1619 = vpack.c.b16 %v1343, %v1339
        %v1620 = vpack.c.b16 %v1344, %v1340
        %v1621 = vpack.c.b16 %v1345, %v1341
        %v1622 = vpack.c.b16 %v1350, %v1346
        %v1623 = vpack.c.b16 %v1351, %v1347
        %v1624 = vpack.c.b16 %v1352, %v1348
        %v1625 = vpack.c.b16 %v1353, %v1349
        %v1626 = vpack.c.b16 %v1358, %v1354
        %v1627 = vpack.c.b16 %v1359, %v1355
        %v1628 = vpack.c.b16 %v1360, %v1356
        %v1629 = vpack.c.b16 %v1361, %v1357
        %v1630 = vpack.c.b16 %v1366, %v1362
        %v1631 = vpack.c.b16 %v1367, %v1363
        %v1632 = vpack.c.b16 %v1368, %v1364
        %v1633 = vpack.c.b16 %v1369, %v1365
        %v1634 = vpack.c.b16 %v1374, %v1370
        %v1635 = vpack.c.b16 %v1375, %v1371
        %v1636 = vpack.c.b16 %v1376, %v1372
        %v1637 = vpack.c.b16 %v1377, %v1373
        %v1638 = vpack.c.b16 %v1382, %v1378
        %v1639 = vpack.c.b16 %v1383, %v1379
        %v1640 = vpack.c.b16 %v1384, %v1380
        %v1641 = vpack.c.b16 %v1385, %v1381
        %v1642 = vpack.c.b16 %v1390, %v1386
        %v1643 = vpack.c.b16 %v1391, %v1387
        %v1644 = vpack.c.b16 %v1392, %v1388
        %v1645 = vpack.c.b16 %v1393, %v1389
        %v1646 = vpack.c.b16 %v1398, %v1394
        %v1647 = vpack.c.b16 %v1399, %v1395
        %v1648 = vpack.c.b16 %v1400, %v1396
        %v1649 = vpack.c.b16 %v1401, %v1397
        %v1650 = vpack.c.b16 %v1406, %v1402
        %v1651 = vpack.c.b16 %v1407, %v1403
        %v1652 = vpack.c.b16 %v1408, %v1404
        %v1653 = vpack.c.b16 %v1409, %v1405
        %v1654 = vpack.c.b16 %v1414, %v1410
        %v1655 = vpack.c.b16 %v1415, %v1411
        %v1656 = vpack.c.b16 %v1416, %v1412
        %v1657 = vpack.c.b16 %v1417, %v1413
        %v1658 = vpack.c.b16 %v1422, %v1418
        %v1659 = vpack.c.b16 %v1423, %v1419
        %v1660 = vpack.c.b16 %v1424, %v1420
        %v1661 = vpack.c.b16 %v1425, %v1421
        %v1662 = vpack.c.b16 %v1430, %v1426
        %v1663 = vpack.c.b16 %v1431, %v1427
        %v1664 = vpack.c.b16 %v1432, %v1428
        %v1665 = vpack.c.b16 %v1433, %v1429
        %v1666 = vpack.c.b16 %v1438, %v1434
        %v1667 = vpack.c.b16 %v1439, %v1435
        %v1668 = vpack.c.b16 %v1440, %v1436
        %v1669 = vpack.c.b16 %v1441, %v1437
        %v1670 = vpack.c.b16 %v1446, %v1442
        %v1671 = vpack.c.b16 %v1447, %v1443
        %v1672 = vpack.c.b16 %v1448, %v1444
        %v1673 = vpack.c.b16 %v1449, %v1445
        %v1674 = vpack.c.b16 %v1454, %v1450
        %v1675 = vpack.c.b16 %v1455, %v1451
        %v1676 = vpack.c.b16 %v1456, %v1452
        %v1677 = vpack.c.b16 %v1457, %v1453
        %v1678 = vpack.c.b16 %v1462, %v1458
        %v1679 = vpack.c.b16 %v1463, %v1459
        %v1680 = vpack.c.b16 %v1464, %v1460
        %v1681 = vpack.c.b16 %v1465, %v1461
        %v1682 = vpack.c.b16 %v1470, %v1466
        %v1683 = vpack.c.b16 %v1471, %v1467
        %v1684 = vpack.c.b16 %v1472, %v1468
        %v1685 = vpack.c.b16 %v1473, %v1469
        %v1686 = vpack.c.b16 %v1478, %v1474
        %v1687 = vpack.c.b16 %v1479, %v1475
        %v1688 = vpack.c.b16 %v1480, %v1476
        %v1689 = vpack.c.b16 %v1481, %v1477
        %v1690 = vpack.c.b16 %v1486, %v1482
        %v1691 = vpack.c.b16 %v1487, %v1483
        %v1692 = vpack.c.b16 %v1488, %v1484
        %v1693 = vpack.c.b16 %v1489, %v1485
        %v1694 = vpack.c.b16 %v1494, %v1490
        %v1695 = vpack.c.b16 %v1495, %v1491
        %v1696 = vpack.c.b16 %v1496, %v1492
        %v1697 = vpack.c.b16 %v1497, %v1493
        %v1698 = vpack.c.b16 %v1502, %v1498
        %v1699 = vpack.c.b16 %v1503, %v1499
        %v1700 = vpack.c.b16 %v1504, %v1500
        %v1701 = vpack.c.b16 %v1505, %v1501
        %v1702 = vpack.c.b16 %v1510, %v1506
        %v1703 = vpack.c.b16 %v1511, %v1507
        %v1704 = vpack.c.b16 %v1512, %v1508
        %v1705 = vpack.c.b16 %v1513, %v1509
        %1898 = vmatprep.subr.bf16.mxu0 %v1543
        %1899 = vmatpush1.bf16.msra.mxu0 %v1542
        %1900 = vmatprep.subr.bf16.mxu0 %v1539
        %1901 = vmatpush1.bf16.msra.mxu0 %v1538
        %1902 = vmatprep.subr.bf16.mxu0 %v1535
        %1903 = vmatpush1.bf16.msra.mxu0 %v1534
        %1904 = vmatprep.subr.bf16.mxu0 %v1531
        %1905 = vmatpush1.bf16.msra.mxu0 %v1530
        %1906 = vmatprep.subr.bf16.mxu0 %v1527
        %1907 = vmatpush1.bf16.msra.mxu0 %v1526
        %1908 = vmatprep.subr.bf16.mxu0 %v1523
        %1909 = vmatpush1.bf16.msra.mxu0 %v1522
        %1910 = vmatprep.subr.bf16.mxu0 %v1519
        %1911 = vmatpush1.bf16.msra.mxu0 %v1518
        %1912 = vmatprep.subr.bf16.mxu0 %v1515
        %1913 = vmatpush1.bf16.msra.mxu0 %v1514
        %1914 = vmatprep.subr.bf16.mxu0 %v1575
        %1915 = vmatpush2.bf16.msra.mxu0 %v1574
        %1916 = vmatprep.subr.bf16.mxu0 %v1571
        %1917 = vmatpush2.bf16.msra.mxu0 %v1570
        %1918 = vmatprep.subr.bf16.mxu0 %v1567
        %1919 = vmatpush2.bf16.msra.mxu0 %v1566
        %1920 = vmatprep.subr.bf16.mxu0 %v1563
        %1921 = vmatpush2.bf16.msra.mxu0 %v1562
        %1922 = vmatprep.subr.bf16.mxu0 %v1559
        %1923 = vmatpush2.bf16.msra.mxu0 %v1558
        %1924 = vmatprep.subr.bf16.mxu0 %v1555
        %1925 = vmatpush2.bf16.msra.mxu0 %v1554
        %1926 = vmatprep.subr.bf16.mxu0 %v1551
        %1927 = vmatpush2.bf16.msra.mxu0 %v1550
        %1928 = vmatprep.subr.bf16.mxu0 %v1547
        %1929 = vmatpush2.bf16.msra.mxu0 %v1546
        %1930 = vmatprep.mubr.bf16.mxu0 %v927
        %1931 = vmatmul.mubr.bf16.gmra.mxu0 %v926
        %v1932 = vpop.f32.mrf.mxu0
        %v1933 = vadd.f32 %v891, %v1932
        %v1934 = vpop.f32.mrf.mxu0
        %v1935 = vadd.f32 %v895, %v1934
        %v1936 = vpop.f32.mrf.mxu0
        %v1937 = vadd.f32 %v891, %v1936
        %v1938 = vpop.f32.mrf.mxu0
        %v1939 = vadd.f32 %v895, %v1938
        %1940 = vdwg.mxu0
        %1941 = vmatprep.subr.bf16.mxu0 %v1607
        %1942 = vmatpush1.bf16.msra.mxu0 %v1606
        %1943 = vmatprep.subr.bf16.mxu0 %v1603
        %1944 = vmatpush1.bf16.msra.mxu0 %v1602
        %1945 = vmatprep.subr.bf16.mxu0 %v1599
        %1946 = vmatpush1.bf16.msra.mxu0 %v1598
        %1947 = vmatprep.subr.bf16.mxu0 %v1595
        %1948 = vmatpush1.bf16.msra.mxu0 %v1594
        %1949 = vmatprep.subr.bf16.mxu0 %v1591
        %1950 = vmatpush1.bf16.msra.mxu0 %v1590
        %1951 = vmatprep.subr.bf16.mxu0 %v1587
        %1952 = vmatpush1.bf16.msra.mxu0 %v1586
        %1953 = vmatprep.subr.bf16.mxu0 %v1583
        %1954 = vmatpush1.bf16.msra.mxu0 %v1582
        %1955 = vmatprep.subr.bf16.mxu0 %v1579
        %1956 = vmatpush1.bf16.msra.mxu0 %v1578
        %1957 = vmatprep.subr.bf16.mxu0 %v1639
        %1958 = vmatpush2.bf16.msra.mxu0 %v1638
        %1959 = vmatprep.subr.bf16.mxu0 %v1635
        %1960 = vmatpush2.bf16.msra.mxu0 %v1634
        %1961 = vmatprep.subr.bf16.mxu0 %v1631
        %1962 = vmatpush2.bf16.msra.mxu0 %v1630
        %1963 = vmatprep.subr.bf16.mxu0 %v1627
        %1964 = vmatpush2.bf16.msra.mxu0 %v1626
        %1965 = vmatprep.subr.bf16.mxu0 %v1623
        %1966 = vmatpush2.bf16.msra.mxu0 %v1622
        %1967 = vmatprep.subr.bf16.mxu0 %v1619
        %1968 = vmatpush2.bf16.msra.mxu0 %v1618
        %1969 = vmatprep.subr.bf16.mxu0 %v1615
        %1970 = vmatpush2.bf16.msra.mxu0 %v1614
        %1971 = vmatprep.subr.bf16.mxu0 %v1611
        %1972 = vmatpush2.bf16.msra.mxu0 %v1610
        %1973 = vmatprep.mubr.bf16.mxu0 %v929
        %1974 = vmatmul.mubr.bf16.gmra.mxu0 %v928
        %v1975 = vpop.f32.mrf.mxu0
        %v1976 = vadd.f32 %v1933, %v1975
        %v1977 = vpop.f32.mrf.mxu0
        %v1978 = vadd.f32 %v1935, %v1977
        %v1979 = vpop.f32.mrf.mxu0
        %v1980 = vadd.f32 %v1937, %v1979
        %v1981 = vpop.f32.mrf.mxu0
        %v1982 = vadd.f32 %v1939, %v1981
        %1983 = vdwg.mxu0
        %1984 = vmatprep.subr.bf16.mxu0 %v1671
        %1985 = vmatpush1.bf16.msra.mxu0 %v1670
        %1986 = vmatprep.subr.bf16.mxu0 %v1667
        %1987 = vmatpush1.bf16.msra.mxu0 %v1666
        %1988 = vmatprep.subr.bf16.mxu0 %v1663
        %1989 = vmatpush1.bf16.msra.mxu0 %v1662
        %1990 = vmatprep.subr.bf16.mxu0 %v1659
        %1991 = vmatpush1.bf16.msra.mxu0 %v1658
        %1992 = vmatprep.subr.bf16.mxu0 %v1655
        %1993 = vmatpush1.bf16.msra.mxu0 %v1654
        %1994 = vmatprep.subr.bf16.mxu0 %v1651
        %1995 = vmatpush1.bf16.msra.mxu0 %v1650
        %1996 = vmatprep.subr.bf16.mxu0 %v1647
        %1997 = vmatpush1.bf16.msra.mxu0 %v1646
        %1998 = vmatprep.subr.bf16.mxu0 %v1643
        %1999 = vmatpush1.bf16.msra.mxu0 %v1642
        %2000 = vmatprep.subr.bf16.mxu0 %v1703
        %2001 = vmatpush2.bf16.msra.mxu0 %v1702
        %2002 = vmatprep.subr.bf16.mxu0 %v1699
        %2003 = vmatpush2.bf16.msra.mxu0 %v1698
        %2004 = vmatprep.subr.bf16.mxu0 %v1695
        %2005 = vmatpush2.bf16.msra.mxu0 %v1694
        %2006 = vmatprep.subr.bf16.mxu0 %v1691
        %2007 = vmatpush2.bf16.msra.mxu0 %v1690
        %2008 = vmatprep.subr.bf16.mxu0 %v1687
        %2009 = vmatpush2.bf16.msra.mxu0 %v1686
        %2010 = vmatprep.subr.bf16.mxu0 %v1683
        %2011 = vmatpush2.bf16.msra.mxu0 %v1682
        %2012 = vmatprep.subr.bf16.mxu0 %v1679
        %2013 = vmatpush2.bf16.msra.mxu0 %v1678
        %2014 = vmatprep.subr.bf16.mxu0 %v1675
        %2015 = vmatpush2.bf16.msra.mxu0 %v1674
        %2016 = vmatprep.mubr.bf16.mxu0 %v931
        %2017 = vmatmul.mubr.bf16.gmra.mxu0 %v930
        %v2018 = vpop.f32.mrf.mxu0
        %v2019 = vadd.f32 %v1976, %v2018
        %v2020 = vpop.f32.mrf.mxu0
        %v2021 = vadd.f32 %v1978, %v2020
        %v2022 = vpop.f32.mrf.mxu0
        %v2023 = vadd.f32 %v1980, %v2022
        %v2024 = vpop.f32.mrf.mxu0
        %v2025 = vadd.f32 %v1982, %v2024
        %2026 = vdwg.mxu0
        %2027 = vmatprep.subr.bf16.mxu0 %v1545
        %2028 = vmatpush1.bf16.msra.mxu0 %v1544
        %2029 = vmatprep.subr.bf16.mxu0 %v1541
        %2030 = vmatpush1.bf16.msra.mxu0 %v1540
        %2031 = vmatprep.subr.bf16.mxu0 %v1537
        %2032 = vmatpush1.bf16.msra.mxu0 %v1536
        %2033 = vmatprep.subr.bf16.mxu0 %v1533
        %2034 = vmatpush1.bf16.msra.mxu0 %v1532
        %2035 = vmatprep.subr.bf16.mxu0 %v1529
        %2036 = vmatpush1.bf16.msra.mxu0 %v1528
        %2037 = vmatprep.subr.bf16.mxu0 %v1525
        %2038 = vmatpush1.bf16.msra.mxu0 %v1524
        %2039 = vmatprep.subr.bf16.mxu0 %v1521
        %2040 = vmatpush1.bf16.msra.mxu0 %v1520
        %2041 = vmatprep.subr.bf16.mxu0 %v1517
        %2042 = vmatpush1.bf16.msra.mxu0 %v1516
        %2043 = vmatprep.subr.bf16.mxu0 %v1577
        %2044 = vmatpush2.bf16.msra.mxu0 %v1576
        %2045 = vmatprep.subr.bf16.mxu0 %v1573
        %2046 = vmatpush2.bf16.msra.mxu0 %v1572
        %2047 = vmatprep.subr.bf16.mxu0 %v1569
        %2048 = vmatpush2.bf16.msra.mxu0 %v1568
        %2049 = vmatprep.subr.bf16.mxu0 %v1565
        %2050 = vmatpush2.bf16.msra.mxu0 %v1564
        %2051 = vmatprep.subr.bf16.mxu0 %v1561
        %2052 = vmatpush2.bf16.msra.mxu0 %v1560
        %2053 = vmatprep.subr.bf16.mxu0 %v1557
        %2054 = vmatpush2.bf16.msra.mxu0 %v1556
        %2055 = vmatprep.subr.bf16.mxu0 %v1553
        %2056 = vmatpush2.bf16.msra.mxu0 %v1552
        %2057 = vmatprep.subr.bf16.mxu0 %v1549
        %2058 = vmatpush2.bf16.msra.mxu0 %v1548
        %2059 = vmatprep.mubr.bf16.mxu0 %v927
        %2060 = vmatmul.mubr.bf16.gmra.mxu0 %v926
        %v2061 = vpop.f32.mrf.mxu0
        %v2062 = vadd.f32 %v899, %v2061
        %v2063 = vpop.f32.mrf.mxu0
        %v2064 = vadd.f32 %v903, %v2063
        %v2065 = vpop.f32.mrf.mxu0
        %v2066 = vadd.f32 %v899, %v2065
        %v2067 = vpop.f32.mrf.mxu0
        %v2068 = vadd.f32 %v903, %v2067
        %2069 = vdwg.mxu0
        %2070 = vmatprep.subr.bf16.mxu0 %v1609
        %2071 = vmatpush1.bf16.msra.mxu0 %v1608
        %2072 = vmatprep.subr.bf16.mxu0 %v1605
        %2073 = vmatpush1.bf16.msra.mxu0 %v1604
        %2074 = vmatprep.subr.bf16.mxu0 %v1601
        %2075 = vmatpush1.bf16.msra.mxu0 %v1600
        %2076 = vmatprep.subr.bf16.mxu0 %v1597
        %2077 = vmatpush1.bf16.msra.mxu0 %v1596
        %2078 = vmatprep.subr.bf16.mxu0 %v1593
        %2079 = vmatpush1.bf16.msra.mxu0 %v1592
        %2080 = vmatprep.subr.bf16.mxu0 %v1589
        %2081 = vmatpush1.bf16.msra.mxu0 %v1588
        %2082 = vmatprep.subr.bf16.mxu0 %v1585
        %2083 = vmatpush1.bf16.msra.mxu0 %v1584
        %2084 = vmatprep.subr.bf16.mxu0 %v1581
        %2085 = vmatpush1.bf16.msra.mxu0 %v1580
        %2086 = vmatprep.subr.bf16.mxu0 %v1641
        %2087 = vmatpush2.bf16.msra.mxu0 %v1640
        %2088 = vmatprep.subr.bf16.mxu0 %v1637
        %2089 = vmatpush2.bf16.msra.mxu0 %v1636
        %2090 = vmatprep.subr.bf16.mxu0 %v1633
        %2091 = vmatpush2.bf16.msra.mxu0 %v1632
        %2092 = vmatprep.subr.bf16.mxu0 %v1629
        %2093 = vmatpush2.bf16.msra.mxu0 %v1628
        %2094 = vmatprep.subr.bf16.mxu0 %v1625
        %2095 = vmatpush2.bf16.msra.mxu0 %v1624
        %2096 = vmatprep.subr.bf16.mxu0 %v1621
        %2097 = vmatpush2.bf16.msra.mxu0 %v1620
        %2098 = vmatprep.subr.bf16.mxu0 %v1617
        %2099 = vmatpush2.bf16.msra.mxu0 %v1616
        %2100 = vmatprep.subr.bf16.mxu0 %v1613
        %2101 = vmatpush2.bf16.msra.mxu0 %v1612
        %2102 = vmatprep.mubr.bf16.mxu0 %v929
        %2103 = vmatmul.mubr.bf16.gmra.mxu0 %v928
        %v2104 = vpop.f32.mrf.mxu0
        %v2105 = vadd.f32 %v2062, %v2104
        %v2106 = vpop.f32.mrf.mxu0
        %v2107 = vadd.f32 %v2064, %v2106
        %v2108 = vpop.f32.mrf.mxu0
        %v2109 = vadd.f32 %v2066, %v2108
        %v2110 = vpop.f32.mrf.mxu0
        %v2111 = vadd.f32 %v2068, %v2110
        %2112 = vdwg.mxu0
        %2113 = vmatprep.subr.bf16.mxu0 %v1673
        %2114 = vmatpush1.bf16.msra.mxu0 %v1672
        %2115 = vmatprep.subr.bf16.mxu0 %v1669
        %2116 = vmatpush1.bf16.msra.mxu0 %v1668
        %2117 = vmatprep.subr.bf16.mxu0 %v1665
        %2118 = vmatpush1.bf16.msra.mxu0 %v1664
        %2119 = vmatprep.subr.bf16.mxu0 %v1661
        %2120 = vmatpush1.bf16.msra.mxu0 %v1660
        %2121 = vmatprep.subr.bf16.mxu0 %v1657
        %2122 = vmatpush1.bf16.msra.mxu0 %v1656
        %2123 = vmatprep.subr.bf16.mxu0 %v1653
        %2124 = vmatpush1.bf16.msra.mxu0 %v1652
        %2125 = vmatprep.subr.bf16.mxu0 %v1649
        %2126 = vmatpush1.bf16.msra.mxu0 %v1648
        %2127 = vmatprep.subr.bf16.mxu0 %v1645
        %2128 = vmatpush1.bf16.msra.mxu0 %v1644
        %2129 = vmatprep.subr.bf16.mxu0 %v1705
        %2130 = vmatpush2.bf16.msra.mxu0 %v1704
        %2131 = vmatprep.subr.bf16.mxu0 %v1701
        %2132 = vmatpush2.bf16.msra.mxu0 %v1700
        %2133 = vmatprep.subr.bf16.mxu0 %v1697
        %2134 = vmatpush2.bf16.msra.mxu0 %v1696
        %2135 = vmatprep.subr.bf16.mxu0 %v1693
        %2136 = vmatpush2.bf16.msra.mxu0 %v1692
        %2137 = vmatprep.subr.bf16.mxu0 %v1689
        %2138 = vmatpush2.bf16.msra.mxu0 %v1688
        %2139 = vmatprep.subr.bf16.mxu0 %v1685
        %2140 = vmatpush2.bf16.msra.mxu0 %v1684
        %2141 = vmatprep.subr.bf16.mxu0 %v1681
        %2142 = vmatpush2.bf16.msra.mxu0 %v1680
        %2143 = vmatprep.subr.bf16.mxu0 %v1677
        %2144 = vmatpush2.bf16.msra.mxu0 %v1676
        %2145 = vmatprep.mubr.bf16.mxu0 %v931
        %2146 = vmatmul.mubr.bf16.gmra.mxu0 %v930
        %v2147 = vpop.f32.mrf.mxu0
        %v2148 = vadd.f32 %v2105, %v2147
        %v2149 = vpop.f32.mrf.mxu0
        %v2150 = vadd.f32 %v2107, %v2149
        %v2151 = vpop.f32.mrf.mxu0
        %v2152 = vadd.f32 %v2109, %v2151
        %v2153 = vpop.f32.mrf.mxu0
        %v2154 = vadd.f32 %v2111, %v2153
        %2155 = vdwg.mxu0
        %v2156 = vmax.f32 %v2019, 0.0
        %v2157 = vmax.f32 %v2021, 0.0
        %v2158 = vmax.f32 %v2148, 0.0
        %v2159 = vmax.f32 %v2150, 0.0
        %v2160 = vmax.f32 %v2023, 0.0
        %v2161 = vmax.f32 %v2025, 0.0
        %v2162 = vmax.f32 %v2152, 0.0
        %v2163 = vmax.f32 %v2154, 0.0
        %v2164 = vld [vmem:[#allocation2] sm:$0xff]
        %v2165 = vld [vmem:[#allocation2 + $0x8] sm:$0xff]
        %v2166 = vpack.c.bf16 %v2160, %v2156
        %v2167 = vpack.c.bf16 %v2161, %v2157
        %v2168 = vpack.c.bf16 %v2162, %v2158
        %v2169 = vpack.c.bf16 %v2163, %v2159
        %v2170 = vld [vmem:[%s679] sm:$0xf]
        %v2171 = vld [vmem:[%s679 + $0x4] sm:$0xf]
        %v2172 = vld [vmem:[%s679 + $0x8] sm:$0xf]
        %v2173 = vld [vmem:[%s679 + $0xc] sm:$0xf]
        %v2174 = vld [vmem:[%s679 + $0x10] sm:$0xf]
        %v2175 = vld [vmem:[%s679 + $0x14] sm:$0xf]
        %v2176 = vld [vmem:[%s679 + $0x18] sm:$0xf]
        %v2177 = vld [vmem:[%s679 + $0x1c] sm:$0xf]
        %v2178 = vld [vmem:[%s679 + $0x20] sm:$0xf]
        %v2179 = vld [vmem:[%s679 + $0x24] sm:$0xf]
        %v2180 = vld [vmem:[%s679 + $0x28] sm:$0xf]
        %v2181 = vld [vmem:[%s679 + $0x2c] sm:$0xf]
        %v2182 = vld [vmem:[%s679 + $0x30] sm:$0xf]
        %v2183 = vld [vmem:[%s679 + $0x34] sm:$0xf]
        %v2184 = vld [vmem:[%s679 + $0x38] sm:$0xf]
        %v2185 = vld [vmem:[%s679 + $0x3c] sm:$0xf]
        %v2186 = vld [vmem:[%s679 + $0x40] sm:$0xf]
        %v2187 = vld [vmem:[%s679 + $0x44] sm:$0xf]
        %v2188 = vld [vmem:[%s679 + $0x48] sm:$0xf]
        %v2189 = vld [vmem:[%s679 + $0x4c] sm:$0xf]
        %v2190 = vld [vmem:[%s679 + $0x50] sm:$0xf]
        %v2191 = vld [vmem:[%s679 + $0x54] sm:$0xf]
        %v2192 = vld [vmem:[%s679 + $0x58] sm:$0xf]
        %v2193 = vld [vmem:[%s679 + $0x5c] sm:$0xf]
        %v2194 = vld [vmem:[%s679 + $0x60] sm:$0xf]
        %v2195 = vld [vmem:[%s679 + $0x64] sm:$0xf]
        %v2196 = vld [vmem:[%s679 + $0x68] sm:$0xf]
        %v2197 = vld [vmem:[%s679 + $0x6c] sm:$0xf]
        %v2198 = vld [vmem:[%s679 + $0x70] sm:$0xf]
        %v2199 = vld [vmem:[%s679 + $0x74] sm:$0xf]
        %v2200 = vld [vmem:[%s679 + $0x78] sm:$0xf]
        %v2201 = vld [vmem:[%s679 + $0x7c] sm:$0xf]
        %v2202 = vld [vmem:[%s679 + $0x80] sm:$0xf]
        %v2203 = vld [vmem:[%s679 + $0x84] sm:$0xf]
        %v2204 = vld [vmem:[%s679 + $0x88] sm:$0xf]
        %v2205 = vld [vmem:[%s679 + $0x8c] sm:$0xf]
        %v2206 = vld [vmem:[%s679 + $0x90] sm:$0xf]
        %v2207 = vld [vmem:[%s679 + $0x94] sm:$0xf]
        %v2208 = vld [vmem:[%s679 + $0x98] sm:$0xf]
        %v2209 = vld [vmem:[%s679 + $0x9c] sm:$0xf]
        %v2210 = vld [vmem:[%s679 + $0xa0] sm:$0xf]
        %v2211 = vld [vmem:[%s679 + $0xa4] sm:$0xf]
        %v2212 = vld [vmem:[%s679 + $0xa8] sm:$0xf]
        %v2213 = vld [vmem:[%s679 + $0xac] sm:$0xf]
        %v2214 = vld [vmem:[%s679 + $0xb0] sm:$0xf]
        %v2215 = vld [vmem:[%s679 + $0xb4] sm:$0xf]
        %v2216 = vld [vmem:[%s679 + $0xb8] sm:$0xf]
        %v2217 = vld [vmem:[%s679 + $0xbc] sm:$0xf]
        %v2218 = vld [vmem:[%s679 + $0xc0] sm:$0xf]
        %v2219 = vld [vmem:[%s679 + $0xc4] sm:$0xf]
        %v2220 = vld [vmem:[%s679 + $0xc8] sm:$0xf]
        %v2221 = vld [vmem:[%s679 + $0xcc] sm:$0xf]
        %v2222 = vld [vmem:[%s679 + $0xd0] sm:$0xf]
        %v2223 = vld [vmem:[%s679 + $0xd4] sm:$0xf]
        %v2224 = vld [vmem:[%s679 + $0xd8] sm:$0xf]
        %v2225 = vld [vmem:[%s679 + $0xdc] sm:$0xf]
        %v2226 = vld [vmem:[%s679 + $0xe0] sm:$0xf]
        %v2227 = vld [vmem:[%s679 + $0xe4] sm:$0xf]
        %v2228 = vld [vmem:[%s679 + $0xe8] sm:$0xf]
        %v2229 = vld [vmem:[%s679 + $0xec] sm:$0xf]
        %v2230 = vld [vmem:[%s679 + $0xf0] sm:$0xf]
        %v2231 = vld [vmem:[%s679 + $0xf4] sm:$0xf]
        %v2232 = vld [vmem:[%s679 + $0xf8] sm:$0xf]
        %v2233 = vld [vmem:[%s679 + $0xfc] sm:$0xf]
        %v2298 = vunpack.c.l.b16 %v2170
        %v2299 = vunpack.c.l.b16 %v2171
        %v2300 = vunpack.c.l.b16 %v2172
        %v2301 = vunpack.c.l.b16 %v2173
        %v2302 = vunpack.c.l.b16 %v2174
        %v2303 = vunpack.c.l.b16 %v2175
        %v2304 = vunpack.c.l.b16 %v2176
        %v2305 = vunpack.c.l.b16 %v2177
        %v2306 = vunpack.c.l.b16 %v2178
        %v2307 = vunpack.c.l.b16 %v2179
        %v2308 = vunpack.c.l.b16 %v2180
        %v2309 = vunpack.c.l.b16 %v2181
        %v2310 = vunpack.c.l.b16 %v2182
        %v2311 = vunpack.c.l.b16 %v2183
        %v2312 = vunpack.c.l.b16 %v2184
        %v2313 = vunpack.c.l.b16 %v2185
        %v2314 = vunpack.c.l.b16 %v2186
        %v2315 = vunpack.c.l.b16 %v2187
        %v2316 = vunpack.c.l.b16 %v2188
        %v2317 = vunpack.c.l.b16 %v2189
        %v2318 = vunpack.c.l.b16 %v2190
        %v2319 = vunpack.c.l.b16 %v2191
        %v2320 = vunpack.c.l.b16 %v2192
        %v2321 = vunpack.c.l.b16 %v2193
        %v2322 = vunpack.c.l.b16 %v2194
        %v2323 = vunpack.c.l.b16 %v2195
        %v2324 = vunpack.c.l.b16 %v2196
        %v2325 = vunpack.c.l.b16 %v2197
        %v2326 = vunpack.c.l.b16 %v2198
        %v2327 = vunpack.c.l.b16 %v2199
        %v2328 = vunpack.c.l.b16 %v2200
        %v2329 = vunpack.c.l.b16 %v2201
        %v2330 = vunpack.c.l.b16 %v2202
        %v2331 = vunpack.c.l.b16 %v2203
        %v2332 = vunpack.c.l.b16 %v2204
        %v2333 = vunpack.c.l.b16 %v2205
        %v2334 = vunpack.c.l.b16 %v2206
        %v2335 = vunpack.c.l.b16 %v2207
        %v2336 = vunpack.c.l.b16 %v2208
        %v2337 = vunpack.c.l.b16 %v2209
        %v2338 = vunpack.c.l.b16 %v2210
        %v2339 = vunpack.c.l.b16 %v2211
        %v2340 = vunpack.c.l.b16 %v2212
        %v2341 = vunpack.c.l.b16 %v2213
        %v2342 = vunpack.c.l.b16 %v2214
        %v2343 = vunpack.c.l.b16 %v2215
        %v2344 = vunpack.c.l.b16 %v2216
        %v2345 = vunpack.c.l.b16 %v2217
        %v2346 = vunpack.c.l.b16 %v2218
        %v2347 = vunpack.c.l.b16 %v2219
        %v2348 = vunpack.c.l.b16 %v2220
        %v2349 = vunpack.c.l.b16 %v2221
        %v2350 = vunpack.c.l.b16 %v2222
        %v2351 = vunpack.c.l.b16 %v2223
        %v2352 = vunpack.c.l.b16 %v2224
        %v2353 = vunpack.c.l.b16 %v2225
        %v2354 = vunpack.c.l.b16 %v2226
        %v2355 = vunpack.c.l.b16 %v2227
        %v2356 = vunpack.c.l.b16 %v2228
        %v2357 = vunpack.c.l.b16 %v2229
        %v2358 = vunpack.c.l.b16 %v2230
        %v2359 = vunpack.c.l.b16 %v2231
        %v2360 = vunpack.c.l.b16 %v2232
        %v2361 = vunpack.c.l.b16 %v2233
        %v2362 = vpack.c.b16 %v2299, %v2298
        %v2363 = vpack.c.b16 %v2301, %v2300
        %v2364 = vpack.c.b16 %v2303, %v2302
        %v2365 = vpack.c.b16 %v2305, %v2304
        %v2366 = vpack.c.b16 %v2307, %v2306
        %v2367 = vpack.c.b16 %v2309, %v2308
        %v2368 = vpack.c.b16 %v2311, %v2310
        %v2369 = vpack.c.b16 %v2313, %v2312
        %v2370 = vpack.c.b16 %v2315, %v2314
        %v2371 = vpack.c.b16 %v2317, %v2316
        %v2372 = vpack.c.b16 %v2319, %v2318
        %v2373 = vpack.c.b16 %v2321, %v2320
        %v2374 = vpack.c.b16 %v2323, %v2322
        %v2375 = vpack.c.b16 %v2325, %v2324
        %v2376 = vpack.c.b16 %v2327, %v2326
        %v2377 = vpack.c.b16 %v2329, %v2328
        %v2378 = vpack.c.b16 %v2331, %v2330
        %v2379 = vpack.c.b16 %v2333, %v2332
        %v2380 = vpack.c.b16 %v2335, %v2334
        %v2381 = vpack.c.b16 %v2337, %v2336
        %v2382 = vpack.c.b16 %v2339, %v2338
        %v2383 = vpack.c.b16 %v2341, %v2340
        %v2384 = vpack.c.b16 %v2343, %v2342
        %v2385 = vpack.c.b16 %v2345, %v2344
        %v2386 = vpack.c.b16 %v2347, %v2346
        %v2387 = vpack.c.b16 %v2349, %v2348
        %v2388 = vpack.c.b16 %v2351, %v2350
        %v2389 = vpack.c.b16 %v2353, %v2352
        %v2390 = vpack.c.b16 %v2355, %v2354
        %v2391 = vpack.c.b16 %v2357, %v2356
        %v2392 = vpack.c.b16 %v2359, %v2358
        %v2393 = vpack.c.b16 %v2361, %v2360
        %2426 = vmatprep.subr.bf16.mxu0 0
        %2427 = vmatpush1.bf16.msra.mxu0 %v2369
        %2428 = vmatprep.subr.bf16.mxu0 0
        %2429 = vmatpush1.bf16.msra.mxu0 %v2368
        %2430 = vmatprep.subr.bf16.mxu0 0
        %2431 = vmatpush1.bf16.msra.mxu0 %v2367
        %2432 = vmatprep.subr.bf16.mxu0 0
        %2433 = vmatpush1.bf16.msra.mxu0 %v2366
        %2434 = vmatprep.subr.bf16.mxu0 0
        %2435 = vmatpush1.bf16.msra.mxu0 %v2365
        %2436 = vmatprep.subr.bf16.mxu0 0
        %2437 = vmatpush1.bf16.msra.mxu0 %v2364
        %2438 = vmatprep.subr.bf16.mxu0 0
        %2439 = vmatpush1.bf16.msra.mxu0 %v2363
        %2440 = vmatprep.subr.bf16.mxu0 0
        %2441 = vmatpush1.bf16.msra.mxu0 %v2362
        %2442 = vmatprep.subr.bf16.mxu0 0
        %2443 = vmatpush2.bf16.msra.mxu0 %v2377
        %2444 = vmatprep.subr.bf16.mxu0 0
        %2445 = vmatpush2.bf16.msra.mxu0 %v2376
        %2446 = vmatprep.subr.bf16.mxu0 0
        %2447 = vmatpush2.bf16.msra.mxu0 %v2375
        %2448 = vmatprep.subr.bf16.mxu0 0
        %2449 = vmatpush2.bf16.msra.mxu0 %v2374
        %2450 = vmatprep.subr.bf16.mxu0 0
        %2451 = vmatpush2.bf16.msra.mxu0 %v2373
        %2452 = vmatprep.subr.bf16.mxu0 0
        %2453 = vmatpush2.bf16.msra.mxu0 %v2372
        %2454 = vmatprep.subr.bf16.mxu0 0
        %2455 = vmatpush2.bf16.msra.mxu0 %v2371
        %2456 = vmatprep.subr.bf16.mxu0 0
        %2457 = vmatpush2.bf16.msra.mxu0 %v2370
        %2458 = vmatprep.mubr.bf16.mxu0 %v2167
        %2459 = vmatmul.mubr.bf16.gmra.mxu0 %v2166
        %v2460 = vpop.f32.mrf.mxu0
        %v2461 = vadd.f32 0.0, %v2460
        %v2462 = vpop.f32.mrf.mxu0
        %v2463 = vpop.f32.mrf.mxu0
        %v2464 = vadd.f32 0.0, %v2463
        %v2465 = vpop.f32.mrf.mxu0
        %2466 = vdwg.mxu0
        %2467 = vmatprep.subr.bf16.mxu0 0
        %2468 = vmatpush1.bf16.msra.mxu0 %v2385
        %2469 = vmatprep.subr.bf16.mxu0 0
        %2470 = vmatpush1.bf16.msra.mxu0 %v2384
        %2471 = vmatprep.subr.bf16.mxu0 0
        %2472 = vmatpush1.bf16.msra.mxu0 %v2383
        %2473 = vmatprep.subr.bf16.mxu0 0
        %2474 = vmatpush1.bf16.msra.mxu0 %v2382
        %2475 = vmatprep.subr.bf16.mxu0 0
        %2476 = vmatpush1.bf16.msra.mxu0 %v2381
        %2477 = vmatprep.subr.bf16.mxu0 0
        %2478 = vmatpush1.bf16.msra.mxu0 %v2380
        %2479 = vmatprep.subr.bf16.mxu0 0
        %2480 = vmatpush1.bf16.msra.mxu0 %v2379
        %2481 = vmatprep.subr.bf16.mxu0 0
        %2482 = vmatpush1.bf16.msra.mxu0 %v2378
        %2483 = vmatprep.subr.bf16.mxu0 0
        %2484 = vmatpush2.bf16.msra.mxu0 %v2393
        %2485 = vmatprep.subr.bf16.mxu0 0
        %2486 = vmatpush2.bf16.msra.mxu0 %v2392
        %2487 = vmatprep.subr.bf16.mxu0 0
        %2488 = vmatpush2.bf16.msra.mxu0 %v2391
        %2489 = vmatprep.subr.bf16.mxu0 0
        %2490 = vmatpush2.bf16.msra.mxu0 %v2390
        %2491 = vmatprep.subr.bf16.mxu0 0
        %2492 = vmatpush2.bf16.msra.mxu0 %v2389
        %2493 = vmatprep.subr.bf16.mxu0 0
        %2494 = vmatpush2.bf16.msra.mxu0 %v2388
        %2495 = vmatprep.subr.bf16.mxu0 0
        %2496 = vmatpush2.bf16.msra.mxu0 %v2387
        %2497 = vmatprep.subr.bf16.mxu0 0
        %2498 = vmatpush2.bf16.msra.mxu0 %v2386
        %2499 = vmatprep.mubr.bf16.mxu0 %v2169
        %2500 = vmatmul.mubr.bf16.gmra.mxu0 %v2168
        %v2501 = vpop.f32.mrf.mxu0
        %v2502 = vadd.f32 %v2461, %v2501
        %v2503 = vpop.f32.mrf.mxu0
        %v2504 = vpop.f32.mrf.mxu0
        %v2505 = vadd.f32 %v2464, %v2504
        %v2506 = vpop.f32.mrf.mxu0
        %2507 = vdwg.mxu0
        %v2508 = vadd.f32 %v2164, %v2502
        %v2509 = vadd.f32 %v2165, %v2505
        %2510 = vst [vmem:[#allocation2] sm:$0xff] %v2508
        %2511 = vst [vmem:[#allocation2 + $0x8] sm:$0xff] %v2509
        %p2512 = scmp.eq.s32.totalorder %s17, 3
        // Predicated region
        $region72: #{tsn_forward.1} parent=62 // pred_check
          %p2513 = pneg %p2512
        $region73: #{tsn_forward.1} parent=62 // pred_check_branch
          %2515 = sbr.rel (%p2513) target = $region75
        $region74: #{tsn_forward.1} parent=62 // pred_region
          %v2516 = vld [vmem:[#allocation2] sm:$0xff]
          %v2517 = vld [vmem:[#allocation2 + $0x8] sm:$0xff]
          %v2518 = vld [vmem:[%s4] sm:$0x1]
          %v2520 = vlaneseq
          %v2521 = vshrl.u32 %v2520, 7
          %v2522 = vsub.s32 0, %v2521
          %v2523 = vrot.slane %v2518, %v2522
          %v2525 = vadd.f32 %v2516, %v2523
          %v2526 = vadd.f32 %v2517, %v2523
          %v2527 = vld [vmem:[%s5] sm:$0x3]
          %vm2528 = vcmask 130048
          %v2530 = vsel %vm2528, %v2527, 0
          %2532 = vmatprep.subr.mxu0 0.0
          %2533 = vmatpush1.msra.mxu0 0.0
          %2534 = vmatprep.subr.mxu0 0.0
          %2535 = vmatpush1.msra.mxu0 0.0
          %2536 = vmatprep.subr.mxu0 0.0
          %2537 = vmatpush1.msra.mxu0 0.0
          %2538 = vmatprep.subr.mxu0 0.0
          %2539 = vmatpush1.msra.mxu0 0.0
          %2540 = vmatprep.subr.mxu0 0.0
          %2541 = vmatpush1.msra.mxu0 0.0
          %2542 = vmatprep.subr.mxu0 0.0
          %2543 = vmatpush1.msra.mxu0 0.0
          %2544 = vmatprep.subr.mxu0 0.0
          %2545 = vmatpush1.msra.mxu0 0.0
          %2546 = vmatprep.subr.mxu0 0.0
          %2547 = vmatpush1.msra.mxu0 0.0
          %2548 = vmatprep.subr.mxu0 0.0
          %2549 = vmatpush1.msra.mxu0 0.0
          %2550 = vmatprep.subr.mxu0 0.0
          %2551 = vmatpush1.msra.mxu0 0.0
          %2552 = vmatprep.subr.mxu0 0.0
          %2553 = vmatpush1.msra.mxu0 0.0
          %2554 = vmatprep.subr.mxu0 0.0
          %2555 = vmatpush1.msra.mxu0 0.0
          %2556 = vmatprep.subr.mxu0 0.0
          %2557 = vmatpush1.msra.mxu0 0.0
          %2558 = vmatprep.subr.mxu0 0.0
          %2559 = vmatpush1.msra.mxu0 0.0
          %2560 = vmatprep.subr.mxu0 0.0
          %2561 = vmatpush1.msra.mxu0 %v2526
          %2562 = vmatprep.subr.mxu0 0.0
          %2563 = vmatpush1.msra.mxu0 %v2525
          %2564 = vmatprep.subr.mxu0 0.0
          %2565 = vmatpush2.msra.mxu0 0.0
          %2566 = vmatprep.subr.mxu0 0.0
          %2567 = vmatpush2.msra.mxu0 0.0
          %2568 = vmatprep.subr.mxu0 0.0
          %2569 = vmatpush2.msra.mxu0 0.0
          %2570 = vmatprep.subr.mxu0 0.0
          %2571 = vmatpush2.msra.mxu0 0.0
          %2572 = vmatprep.subr.mxu0 0.0
          %2573 = vmatpush2.msra.mxu0 0.0
          %2574 = vmatprep.subr.mxu0 0.0
          %2575 = vmatpush2.msra.mxu0 0.0
          %2576 = vmatprep.subr.mxu0 0.0
          %2577 = vmatpush2.msra.mxu0 0.0
          %2578 = vmatprep.subr.mxu0 0.0
          %2579 = vmatpush2.msra.mxu0 0.0
          %2580 = vmatprep.subr.mxu0 0.0
          %2581 = vmatpush2.msra.mxu0 0.0
          %2582 = vmatprep.subr.mxu0 0.0
          %2583 = vmatpush2.msra.mxu0 0.0
          %2584 = vmatprep.subr.mxu0 0.0
          %2585 = vmatpush2.msra.mxu0 0.0
          %2586 = vmatprep.subr.mxu0 0.0
          %2587 = vmatpush2.msra.mxu0 0.0
          %2588 = vmatprep.subr.mxu0 0.0
          %2589 = vmatpush2.msra.mxu0 0.0
          %2590 = vmatprep.subr.mxu0 0.0
          %2591 = vmatpush2.msra.mxu0 0.0
          %2592 = vmatprep.subr.mxu0 0.0
          %2593 = vmatpush2.msra.mxu0 0.0
          %2594 = vmatprep.subr.mxu0 0.0
          %2595 = vmatpush2.msra.mxu0 0.0
          %2596 = vmatprep.mubr.f32.mxu0 0.0
          %2597 = vmatmul.mubr.f32.gmra.mxu0 %v2530
          %v2598 = vpop.f32.mrf.mxu0
          %v2599 = vadd.f32 0.0, %v2598
          %v2600 = vpop.f32.mrf.mxu0
          %2601 = vdwg.mxu0
          %2602 = vst [vmem:[%s6] sm:$0x3] %v2599
        $region75: #{tsn_forward.1} parent=62 // pred_fallthru
          _
        // Predicated region
        $region76: #{tsn_forward.1} parent=62 // pred_check
          %p2603 = pneg %p171
        $region77: #{tsn_forward.1} parent=62 // pred_check_branch
          %2605 = sbr.rel (%p2603) target = $region79
        $region78: #{tsn_forward.1} parent=62 // pred_region
          _
        $region79: #{tsn_forward.1} parent=62 // pred_fallthru
          _
        // Predicated region
        $region80: #{tsn_forward.1} parent=62 // pred_check
          %p2606 = pneg %p171
        $region81: #{tsn_forward.1} parent=62 // pred_check_branch
          %2608 = sbr.rel (%p2606) target = $region83
        $region82: #{tsn_forward.1} parent=62 // pred_region
          _
        $region83: #{tsn_forward.1} parent=62 // pred_fallthru
          _
      $region63: #{tsn_forward.1} parent=5 // pred_fallthru
        _
      %p2609 = scmp.le.s32.totalorder 2, %s12
      // Predicated region
      $region84: #{tsn_forward.1} parent=5 // pred_check
        %p2610 = pneg %p2609
      $region85: #{tsn_forward.1} parent=5 // pred_check_branch
        %2612 = sbr.rel (%p2610) target = $region87
      $region86: #{tsn_forward.1} parent=5 // pred_region
        %s2613 = ssub.s32 %s12, 2
      $region87: #{tsn_forward.1} parent=5 // pred_fallthru
        _
    $region6: #{tsn_forward.1} parent=1 // loop_footer
      %s16 = sadd.s32 1, %s12
    $region7: #{tsn_forward.1} parent=1 // loop_footer_branch
      %11 = sbr.rel target = $region3
    $region8: #{tsn_forward.1} parent=1 // loop_exit
      _

</llo_original>
